<compile_context>
chip_gen: v7x
topology: tpu7x:2x2x1
jax: 0.10.0
libtpu: 0.0.40
codegen_flags: <defaults>
</compile_context>

<pallas_src>
import functools

import jax
import jax.numpy as jnp
from jax.experimental import pallas as pl
from jax.experimental.pallas import tpu as pltpu


_MIB = 1024 * 1024
# Budget cap kept safely below v7x's 64 MiB physical VMEM (leaves headroom for
# compiler-internal scratch); v5e/v6e have 128 MiB physical so this is always
# admissible.
_VMEM_CAP = 56 * _MIB


def _round_up(x, m):
    return ((x + m - 1) // m) * m


def _pick_tile(dim, target, align, min_blocks=1):
    """Largest tile <= target that divides `dim`, is a multiple of `align`, and
    (when possible) leaves at least `min_blocks` grid blocks.  Falls back to
    the full dimension (single block) if nothing divides."""
    cap = max(align, dim // max(min_blocks, 1))
    t = min(target, cap, dim)
    t = max(align, (t // align) * align)
    while t >= align:
        if dim % t == 0:
            return t
        t -= align
    return dim


def _vmem_limit(bytes_needed):
    """Per-call scoped-VMEM budget: what this kernel actually uses plus
    headroom, never above the v7x-safe cap."""
    return int(min(max(bytes_needed + 8 * _MIB, 32 * _MIB), _VMEM_CAP))


# ---------------------------------------------------------------------------
# Kernel 1: per-column sum / sum-of-squares of the flattened activations.
# grid = (S-blocks [parallel], N-blocks [arbitrary]); the (1, ts) accumulators
# stay VMEM-resident across the inner N (reduction) axis.
# ---------------------------------------------------------------------------
def _stats_kernel(x_ref, sum_ref, sq_ref):
    @pl.when(pl.program_id(1) == 0)
    def _init():
        sum_ref[...] = jnp.zeros_like(sum_ref)
        sq_ref[...] = jnp.zeros_like(sq_ref)

    x = x_ref[...]
    sum_ref[...] += jnp.sum(x, axis=0, keepdims=True)
    sq_ref[...] += jnp.sum(x * x, axis=0, keepdims=True)


def column_stats_pallas(x_flat, *, tile_n=512, tile_s=4096):
    n, s = x_flat.shape
    tn = _pick_tile(n, tile_n, 8)
    ts = _pick_tile(s, tile_s, 128)
    block_bytes = tn * ts * 4
    limit = _vmem_limit(2 * block_bytes + 2 * 2 * ts * 4)
    col_sum, col_sq = pl.pallas_call(
        _stats_kernel,
        out_shape=(
            jax.ShapeDtypeStruct((1, s), jnp.float32),
            jax.ShapeDtypeStruct((1, s), jnp.float32),
        ),
        grid=(s // ts, n // tn),
        in_specs=[pl.BlockSpec((tn, ts), lambda j, i: (i, j))],
        out_specs=(
            pl.BlockSpec((1, ts), lambda j, i: (0, j)),
            pl.BlockSpec((1, ts), lambda j, i: (0, j)),
        ),
        compiler_params=pltpu.CompilerParams(
            # S axis parallel (both v7x TCs), N axis is the reduction.
            dimension_semantics=("parallel", "arbitrary"),
            vmem_limit_bytes=limit,
        ),
    )(x_flat)
    return col_sum[0], col_sq[0]


# ---------------------------------------------------------------------------
# Kernel 2a (preferred): resident-weight matmul, single K block.
#   out = x_flat @ W_eff + b_eff
# W/b BlockSpecs are constant across the grid => DMAed once, pinned in VMEM.
# ---------------------------------------------------------------------------
def _linear_resident_kernel(x_ref, w_ref, b_ref, o_ref):
    w = w_ref[...].astype(jnp.float32)
    acc = jnp.dot(x_ref[...], w, preferred_element_type=jnp.float32)
    o_ref[...] = (acc + b_ref[...]).astype(o_ref.dtype)


# ---------------------------------------------------------------------------
# Kernel 2b (fallback): K-tiled matmul with f32 VMEM accumulator, used only
# when W_eff is too large to keep resident.
# ---------------------------------------------------------------------------
def _linear_tiled_kernel(x_ref, w_ref, b_ref, o_ref, acc_ref):
    k = pl.program_id(1)

    @pl.when(k == 0)
    def _init():
        acc_ref[...] = jnp.zeros_like(acc_ref)

    acc_ref[...] += jnp.dot(
        x_ref[...], w_ref[...].astype(jnp.float32),
        preferred_element_type=jnp.float32)

    @pl.when(k == pl.num_programs(1) - 1)
    def _finalize():
        o_ref[...] = (acc_ref[...] + b_ref[...]).astype(o_ref.dtype)


def linear_pallas(x_flat, w_eff_sl, b_eff_l, *, tile_n=256, tile_k=None):
    n, s = x_flat.shape
    l_pad = w_eff_sl.shape[1]
    b_row = b_eff_l.reshape(1, l_pad)

    # Keep >= 2 N-blocks when possible: preserves v7x 2-TC sharding and
    # pipelining depth on all generations.
    tn = _pick_tile(n, tile_n, 8, min_blocks=2)

    x_blk = 2 * tn * s * 4        # double-buffered x slab
    o_blk = 2 * tn * l_pad * 4    # double-buffered output tile
    b_bytes = l_pad * 4

    if tile_k is None:
        w_f32 = s * l_pad * 4
        w_bf16 = s * l_pad * 2
        resident_dtype = None
        if x_blk + o_blk + w_f32 + b_bytes <= _VMEM_CAP - 8 * _MIB:
            resident_dtype = jnp.float32
        elif x_blk + o_blk + w_bf16 + b_bytes <= _VMEM_CAP - 8 * _MIB:
            # Halve resident weight bytes (important on v7x's 64 MiB VMEM);
            # the matmul still accumulates in f32.
            resident_dtype = jnp.bfloat16
        if resident_dtype is not None:
            w_res = w_eff_sl.astype(resident_dtype)
            w_bytes = s * l_pad * jnp.dtype(resident_dtype).itemsize
            limit = _vmem_limit(x_blk + o_blk + w_bytes + b_bytes)
            return pl.pallas_call(
                _linear_resident_kernel,
                out_shape=jax.ShapeDtypeStruct((n, l_pad), jnp.float32),
                grid=(n // tn,),
                in_specs=[
                    pl.BlockSpec((tn, s), lambda i: (i, 0)),
                    pl.BlockSpec((s, l_pad), lambda i: (0, 0)),   # resident W
                    pl.BlockSpec((1, l_pad), lambda i: (0, 0)),   # resident b
                ],
                out_specs=pl.BlockSpec((tn, l_pad), lambda i: (i, 0)),
                compiler_params=pltpu.CompilerParams(
                    dimension_semantics=("parallel",),
                    vmem_limit_bytes=limit,
                ),
            )(x_flat, w_res, b_row)

    # Fallback: K-tiled accumulator matmul (W too big to pin, or tile_k forced).
    tk = _pick_tile(s, tile_k if tile_k is not None else 8192, 128)
    limit = _vmem_limit(
        2 * tn * tk * 4 + 2 * tk * l_pad * 4 + 2 * b_bytes + o_blk
        + tn * l_pad * 4)
    return pl.pallas_call(
        _linear_tiled_kernel,
        out_shape=jax.ShapeDtypeStruct((n, l_pad), jnp.float32),
        grid=(n // tn, s // tk),
        in_specs=[
            pl.BlockSpec((tn, tk), lambda i, k: (i, k)),
            pl.BlockSpec((tk, l_pad), lambda i, k: (k, 0)),
            pl.BlockSpec((1, l_pad), lambda i, k: (0, 0)),
        ],
        out_specs=pl.BlockSpec((tn, l_pad), lambda i, k: (i, 0)),
        scratch_shapes=[pltpu.VMEM((tn, l_pad), jnp.float32)],
        compiler_params=pltpu.CompilerParams(
            dimension_semantics=("parallel", "arbitrary"),
            vmem_limit_bytes=limit,
        ),
    )(x_flat, w_eff_sl, b_row)


# ---------------------------------------------------------------------------
# Forward pass
# ---------------------------------------------------------------------------
def reglog_forward(x_nchw, params, *, eps=1e-5,
                   stats_tile_n=512, stats_tile_s=4096,
                   lin_tile_n=256, lin_tile_k=None):
    n, c, h, w = x_nchw.shape
    hw = h * w
    s = c * hw
    # NCHW -> (N, S): row-major reshape == torch's x.view(x.size(0), -1); no
    # data movement, no transpose.
    x_flat = x_nchw.reshape(n, s)

    # Pass 1 (Pallas): per-column batch stats.
    col_sum, col_sq = column_stats_pallas(
        x_flat, tile_n=stats_tile_n, tile_s=stats_tile_s)

    # Tiny JAX glue: per-channel stats + BN->Linear fold (training-mode BN:
    # biased batch variance, eps=1e-5).
    count = jnp.float32(n * hw)
    ch_sum = col_sum.reshape(c, hw).sum(axis=1)
    ch_sq = col_sq.reshape(c, hw).sum(axis=1)
    mean_c = ch_sum / count
    # Clamp: E[x^2] - mean^2 can go slightly negative under cancellation.
    var_c = jnp.maximum(ch_sq / count - mean_c * mean_c, 0.0)
    scale_c = params["bn_gamma"] * jax.lax.rsqrt(var_c + eps)
    shift_c = params["bn_beta"] - mean_c * scale_c

    scale_s = jnp.repeat(scale_c, hw)      # channel-major flatten order
    shift_s = jnp.repeat(shift_c, hw)

    w_t = params["lin_w"].T                # (S, L); torch Linear stores (L, S)
    w_eff = w_t * scale_s[:, None]
    b_eff = params["lin_b"] + shift_s @ w_t

    # Pad L to a multiple of 128 (lane-dense, unmasked stores); slice after.
    l = w_eff.shape[1]
    l_pad = max(128, _round_up(l, 128))
    if l_pad != l:
        w_eff = jnp.pad(w_eff, ((0, 0), (0, l_pad - l)))
        b_eff = jnp.pad(b_eff, (0, l_pad - l))

    # Pass 2 (Pallas): single matmul; normalized activations never hit HBM.
    out = linear_pallas(x_flat, w_eff, b_eff,
                        tile_n=lin_tile_n, tile_k=lin_tile_k)
    return out[:, :l]


def reglog_ref(x, params, eps=1e-5):
    # Pure-JAX reference (unfused BN -> flatten -> linear).
    mean = jnp.mean(x, axis=(0, 2, 3), keepdims=True)
    var = jnp.mean((x - mean) ** 2, axis=(0, 2, 3), keepdims=True)
    y = (x - mean) * jax.lax.rsqrt(var + eps)
    y = y * params["bn_gamma"].reshape(1, -1, 1, 1) + params["bn_beta"].reshape(1, -1, 1, 1)
    y = y.reshape(x.shape[0], -1)
    return y @ params["lin_w"].T + params["lin_b"]


if __name__ == "__main__":
    # Scaled-down shapes (real RegLog with use_bn=True: C=2048, H=W=2, S=8192).
    N, C, H, W = 16, 256, 2, 2
    num_labels = 16
    S = C * H * W

    key = jax.random.PRNGKey(0)
    kx, kw, kg, kb = jax.random.split(key, 4)
    x = jax.random.normal(kx, (N, C, H, W), dtype=jnp.float32)

    # Module init is gamma=1/beta=0, weight~N(0,0.01), bias=0; perturb
    # gamma/beta slightly so the BN affine fold is actually exercised.
    params = {
        "bn_gamma": 1.0 + 0.1 * jax.random.normal(kg, (C,), dtype=jnp.float32),
        "bn_beta": 0.05 * jax.random.normal(kb, (C,), dtype=jnp.float32),
        "lin_w": 0.01 * jax.random.normal(kw, (num_labels, S), dtype=jnp.float32),
        "lin_b": jnp.zeros((num_labels,), jnp.float32),
    }

    ref = reglog_ref(x, params)

    # Small tiles here so the demo exercises multi-step grids / pipelining and
    # the parallel stats axis; defaults (512 / 4096 / 256 / resident-W) are
    # sized for the real shapes.
    fwd = jax.jit(functools.partial(
        reglog_forward, stats_tile_n=8, stats_tile_s=256, lin_tile_n=8))
    out = jax.block_until_ready(fwd(x, params))
    assert out.shape == (N, num_labels)
    assert jnp.allclose(out, ref, atol=1e-4, rtol=1e-4), \
        float(jnp.max(jnp.abs(out - ref)))

    # Also exercise the K-tiled fallback path (used when W_eff exceeds VMEM).
    fwd_tiled = jax.jit(functools.partial(
        reglog_forward, stats_tile_n=8, stats_tile_s=256,
        lin_tile_n=8, lin_tile_k=512))
    out_tiled = jax.block_until_ready(fwd_tiled(x, params))
    assert jnp.allclose(out_tiled, ref, atol=1e-4, rtol=1e-4), \
        float(jnp.max(jnp.abs(out_tiled - ref)))

    print("KERNEL_OK")
</pallas_src>

<mosaic_0001>
module attributes {stable_mosaic.version = 11 : i64} {
  func.func @_stats_kernel(%arg0: i32, %arg1: i32, %arg2: memref<8x256xf32, #tpu.memory_space<vmem>>, %arg3: memref<1x256xf32, #tpu.memory_space<vmem>>, %arg4: memref<1x256xf32, #tpu.memory_space<vmem>>) attributes {dimension_semantics = [#tpu.dimension_semantics<parallel>, #tpu.dimension_semantics<arbitrary>], iteration_bounds = array<i64: 4, 2>, scalar_prefetch = 0 : i64, scratch_operands = 0 : i64, tpu.core_type = #tpu.core_type<tc>, window_params = [{transform_indices = @transform_0, window_bounds = array<i64: 8, 256>}, {transform_indices = @transform_1, window_bounds = array<i64: 1, 256>}, {transform_indices = @transform_2, window_bounds = array<i64: 1, 256>}]} {
    %c0_i32 = arith.constant 0 : i32
    %0 = arith.cmpi eq, %arg1, %c0_i32 : i32
    %1 = arith.extui %0 : i1 to i32
    %c0_i32_0 = arith.constant 0 : i32
    %2 = arith.cmpi ne, %1, %c0_i32_0 : i32
    scf.if %2 {
      %cst_11 = arith.constant 0.000000e+00 : f32
      %15 = vector.broadcast %cst_11 : f32 to vector<1x256xf32>
      %c0_12 = arith.constant 0 : index
      %c0_13 = arith.constant 0 : index
      %16 = vector.load %arg3[%c0_12, %c0_13] : memref<1x256xf32, #tpu.memory_space<vmem>>, vector<1x256xf32>
      tpu.vector_store %arg3[%c0_12, %c0_13], %15 {strides = array<i32>} : memref<1x256xf32, #tpu.memory_space<vmem>>, vector<1x256xf32>,
      %cst_14 = arith.constant 0.000000e+00 : f32
      %17 = vector.broadcast %cst_14 : f32 to vector<1x256xf32>
      %c0_15 = arith.constant 0 : index
      %c0_16 = arith.constant 0 : index
      %18 = vector.load %arg4[%c0_15, %c0_16] : memref<1x256xf32, #tpu.memory_space<vmem>>, vector<1x256xf32>
      tpu.vector_store %arg4[%c0_15, %c0_16], %17 {strides = array<i32>} : memref<1x256xf32, #tpu.memory_space<vmem>>, vector<1x256xf32>,
    } else {
    }
    %c0 = arith.constant 0 : index
    %c0_1 = arith.constant 0 : index
    %3 = vector.load %arg2[%c0, %c0_1] : memref<8x256xf32, #tpu.memory_space<vmem>>, vector<8x256xf32>
    %c0_2 = arith.constant 0 : index
    %c0_3 = arith.constant 0 : index
    %4 = vector.load %arg3[%c0_2, %c0_3] : memref<1x256xf32, #tpu.memory_space<vmem>>, vector<1x256xf32>
    %cst = arith.constant dense<0.000000e+00> : vector<256xf32>
    %5 = vector.multi_reduction <add>, %3, %cst [0] : vector<8x256xf32> to vector<256xf32>
    %6 = vector.shape_cast %5 : vector<256xf32> to vector<1x256xf32>
    %7 = arith.addf %4, %6 : vector<1x256xf32>
    %c0_4 = arith.constant 0 : index
    %c0_5 = arith.constant 0 : index
    %8 = vector.load %arg3[%c0_4, %c0_5] : memref<1x256xf32, #tpu.memory_space<vmem>>, vector<1x256xf32>
    tpu.vector_store %arg3[%c0_4, %c0_5], %7 {strides = array<i32>} : memref<1x256xf32, #tpu.memory_space<vmem>>, vector<1x256xf32>,
    %c0_6 = arith.constant 0 : index
    %c0_7 = arith.constant 0 : index
    %9 = vector.load %arg4[%c0_6, %c0_7] : memref<1x256xf32, #tpu.memory_space<vmem>>, vector<1x256xf32>
    %10 = arith.mulf %3, %3 : vector<8x256xf32>
    %cst_8 = arith.constant dense<0.000000e+00> : vector<256xf32>
    %11 = vector.multi_reduction <add>, %10, %cst_8 [0] : vector<8x256xf32> to vector<256xf32>
    %12 = vector.shape_cast %11 : vector<256xf32> to vector<1x256xf32>
    %13 = arith.addf %9, %12 : vector<1x256xf32>
    %c0_9 = arith.constant 0 : index
    %c0_10 = arith.constant 0 : index
    %14 = vector.load %arg4[%c0_9, %c0_10] : memref<1x256xf32, #tpu.memory_space<vmem>>, vector<1x256xf32>
    tpu.vector_store %arg4[%c0_9, %c0_10], %13 {strides = array<i32>} : memref<1x256xf32, #tpu.memory_space<vmem>>, vector<1x256xf32>,
    return
  }
  func.func @transform_0(%arg0: i32, %arg1: i32) -> (i32, i32) {
    %c0_i32 = arith.constant 0 : i32
    return %arg1, %arg0 : i32, i32
  }
  func.func @transform_1(%arg0: i32, %arg1: i32) -> (i32, i32) {
    %c0_i32 = arith.constant 0 : i32
    %c0_i32_0 = arith.constant 0 : i32
    return %c0_i32, %arg0 : i32, i32
  }
  func.func @transform_2(%arg0: i32, %arg1: i32) -> (i32, i32) {
    %c0_i32 = arith.constant 0 : i32
    %c0_i32_0 = arith.constant 0 : i32
    return %c0_i32, %arg0 : i32, i32
  }
}

module attributes {stable_mosaic.version = 11 : i64} {
  func.func @_linear_resident_kernel(%arg0: i32, %arg1: memref<8x1024xf32, #tpu.memory_space<vmem>>, %arg2: memref<1024x128xf32, #tpu.memory_space<vmem>>, %arg3: memref<1x128xf32, #tpu.memory_space<vmem>>, %arg4: memref<8x128xf32, #tpu.memory_space<vmem>>) attributes {dimension_semantics = [#tpu.dimension_semantics<parallel>], iteration_bounds = array<i64: 2>, scalar_prefetch = 0 : i64, scratch_operands = 0 : i64, tpu.core_type = #tpu.core_type<tc>, window_params = [{transform_indices = @transform_0, window_bounds = array<i64: 8, 1024>}, {pipeline_mode = #tpu.pipeline_mode<synchronous>, transform_indices = @transform_1, window_bounds = array<i64: 1024, 128>}, {pipeline_mode = #tpu.pipeline_mode<synchronous>, transform_indices = @transform_2, window_bounds = array<i64: 1, 128>}, {transform_indices = @transform_3, window_bounds = array<i64: 8, 128>}]} {
    %c0 = arith.constant 0 : index
    %c0_0 = arith.constant 0 : index
    %0 = vector.load %arg2[%c0, %c0_0] : memref<1024x128xf32, #tpu.memory_space<vmem>>, vector<1024x128xf32>
    %c0_1 = arith.constant 0 : index
    %c0_2 = arith.constant 0 : index
    %1 = vector.load %arg1[%c0_1, %c0_2] : memref<8x1024xf32, #tpu.memory_space<vmem>>, vector<8x1024xf32>
    %cst = arith.constant dense<0.000000e+00> : vector<8x128xf32>
    %2 = tpu.matmul %1, %0, %cst {dimension_numbers = #tpu.dot_dimension_numbers<[1], [0], [0], [1], [0, 0, 1, 1], [], []>} : vector<8x1024xf32>, vector<1024x128xf32>, vector<8x128xf32> -> vector<8x128xf32>
    %c0_3 = arith.constant 0 : index
    %c0_4 = arith.constant 0 : index
    %3 = vector.load %arg3[%c0_3, %c0_4] : memref<1x128xf32, #tpu.memory_space<vmem>>, vector<1x128xf32>
    %4 = vector.broadcast %3 : vector<1x128xf32> to vector<8x128xf32>
    %5 = arith.addf %2, %4 : vector<8x128xf32>
    %c0_5 = arith.constant 0 : index
    %c0_6 = arith.constant 0 : index
    %6 = vector.load %arg4[%c0_5, %c0_6] : memref<8x128xf32, #tpu.memory_space<vmem>>, vector<8x128xf32>
    tpu.vector_store %arg4[%c0_5, %c0_6], %5 {strides = array<i32>} : memref<8x128xf32, #tpu.memory_space<vmem>>, vector<8x128xf32>,
    return
  }
  func.func @transform_0(%arg0: i32) -> (i32, i32) {
    %c0_i32 = arith.constant 0 : i32
    %c0_i32_0 = arith.constant 0 : i32
    return %arg0, %c0_i32 : i32, i32
  }
  func.func @transform_1(%arg0: i32) -> (i32, i32) {
    %c0_i32 = arith.constant 0 : i32
    %c0_i32_0 = arith.constant 0 : i32
    %c0_i32_1 = arith.constant 0 : i32
    return %c0_i32, %c0_i32_0 : i32, i32
  }
  func.func @transform_2(%arg0: i32) -> (i32, i32) {
    %c0_i32 = arith.constant 0 : i32
    %c0_i32_0 = arith.constant 0 : i32
    %c0_i32_1 = arith.constant 0 : i32
    return %c0_i32, %c0_i32_0 : i32, i32
  }
  func.func @transform_3(%arg0: i32) -> (i32, i32) {
    %c0_i32 = arith.constant 0 : i32
    %c0_i32_0 = arith.constant 0 : i32
    return %arg0, %c0_i32 : i32, i32
  }
}

</mosaic_0001>

<llo_original>
// kernel: squeeze.2
$region0: #{squeeze.2}
  %s0 = inlined_call_operand.vmem [shape: f32[1024], index: 0, kind: input, shape index: {}]
  %s1 = inlined_call_operand.vmem [shape: f32[256,4], index: 1, kind: output, shape index: {}]
  %v2 = vld [vmem:[%s0] sm:$0xff]
  %vm3 = vcmask 31744
  %4 = vst.msk [vmem:[%s1] sm:$0x1] %vm3, %v2
  %s5 = scalar_lea.vmem %s1, 31
  %6 = vst.msk [vmem:[%s5] sm:$0x2] %vm3, %v2
  %s7 = scalar_lea.vmem %s1, 62
  %8 = vst.msk [vmem:[%s7] sm:$0x4] %vm3, %v2
  %s9 = scalar_lea.vmem %s1, 93
  %10 = vst.msk [vmem:[%s9] sm:$0x8] %vm3, %v2
  %s11 = scalar_lea.vmem %s1, 124
  %12 = vst.msk [vmem:[%s11] sm:$0x10] %vm3, %v2
  %s13 = scalar_lea.vmem %s1, 155
  %14 = vst.msk [vmem:[%s13] sm:$0x20] %vm3, %v2
  %s15 = scalar_lea.vmem %s1, 186
  %16 = vst.msk [vmem:[%s15] sm:$0x40] %vm3, %v2
  %s17 = scalar_lea.vmem %s1, 217
  %18 = vst.msk [vmem:[%s17] sm:$0x80] %vm3, %v2
  %v19 = vld [vmem:[%s0] sm:$0xff]
  %20 = vrot.lane.b32.xlu0 %v19, 124
  %v21 = vpop.permute.xlu0 %20
  %vm22 = vcmask 31744
  %s23 = scalar_lea.vmem %s1, 1
  %24 = vst.msk [vmem:[%s23] sm:$0x1] %vm22, %v21
  %s25 = scalar_lea.vmem %s1, 32
  %26 = vst.msk [vmem:[%s25] sm:$0x2] %vm22, %v21
  %s27 = scalar_lea.vmem %s1, 63
  %28 = vst.msk [vmem:[%s27] sm:$0x4] %vm22, %v21
  %s29 = scalar_lea.vmem %s1, 94
  %30 = vst.msk [vmem:[%s29] sm:$0x8] %vm22, %v21
  %s31 = scalar_lea.vmem %s1, 125
  %32 = vst.msk [vmem:[%s31] sm:$0x10] %vm22, %v21
  %s33 = scalar_lea.vmem %s1, 156
  %34 = vst.msk [vmem:[%s33] sm:$0x20] %vm22, %v21
  %s35 = scalar_lea.vmem %s1, 187
  %36 = vst.msk [vmem:[%s35] sm:$0x40] %vm22, %v21
  %s37 = scalar_lea.vmem %s1, 218
  %38 = vst.msk [vmem:[%s37] sm:$0x80] %vm22, %v21
  %v39 = vld [vmem:[%s0] sm:$0xff]
  %40 = vrot.lane.b32.xlu0 %v39, 120
  %v41 = vpop.permute.xlu0 %40
  %vm42 = vcmask 31744
  %s43 = scalar_lea.vmem %s1, 2
  %44 = vst.msk [vmem:[%s43] sm:$0x1] %vm42, %v41
  %s45 = scalar_lea.vmem %s1, 33
  %46 = vst.msk [vmem:[%s45] sm:$0x2] %vm42, %v41
  %s47 = scalar_lea.vmem %s1, 64
  %48 = vst.msk [vmem:[%s47] sm:$0x4] %vm42, %v41
  %s49 = scalar_lea.vmem %s1, 95
  %50 = vst.msk [vmem:[%s49] sm:$0x8] %vm42, %v41
  %s51 = scalar_lea.vmem %s1, 126
  %52 = vst.msk [vmem:[%s51] sm:$0x10] %vm42, %v41
  %s53 = scalar_lea.vmem %s1, 157
  %54 = vst.msk [vmem:[%s53] sm:$0x20] %vm42, %v41
  %s55 = scalar_lea.vmem %s1, 188
  %56 = vst.msk [vmem:[%s55] sm:$0x40] %vm42, %v41
  %s57 = scalar_lea.vmem %s1, 219
  %58 = vst.msk [vmem:[%s57] sm:$0x80] %vm42, %v41
  %v59 = vld [vmem:[%s0] sm:$0xff]
  %60 = vrot.lane.b32.xlu0 %v59, 116
  %v61 = vpop.permute.xlu0 %60
  %vm62 = vcmask 31744
  %s63 = scalar_lea.vmem %s1, 3
  %64 = vst.msk [vmem:[%s63] sm:$0x1] %vm62, %v61
  %s65 = scalar_lea.vmem %s1, 34
  %66 = vst.msk [vmem:[%s65] sm:$0x2] %vm62, %v61
  %s67 = scalar_lea.vmem %s1, 65
  %68 = vst.msk [vmem:[%s67] sm:$0x4] %vm62, %v61
  %s69 = scalar_lea.vmem %s1, 96
  %70 = vst.msk [vmem:[%s69] sm:$0x8] %vm62, %v61
  %s71 = scalar_lea.vmem %s1, 127
  %72 = vst.msk [vmem:[%s71] sm:$0x10] %vm62, %v61
  %s73 = scalar_lea.vmem %s1, 158
  %74 = vst.msk [vmem:[%s73] sm:$0x20] %vm62, %v61
  %s75 = scalar_lea.vmem %s1, 189
  %76 = vst.msk [vmem:[%s75] sm:$0x40] %vm62, %v61
  %s77 = scalar_lea.vmem %s1, 220
  %78 = vst.msk [vmem:[%s77] sm:$0x80] %vm62, %v61
  %v79 = vld [vmem:[%s0] sm:$0xff]
  %80 = vrot.lane.b32.xlu0 %v79, 112
  %v81 = vpop.permute.xlu0 %80
  %vm82 = vcmask 31744
  %s83 = scalar_lea.vmem %s1, 4
  %84 = vst.msk [vmem:[%s83] sm:$0x1] %vm82, %v81
  %s85 = scalar_lea.vmem %s1, 35
  %86 = vst.msk [vmem:[%s85] sm:$0x2] %vm82, %v81
  %s87 = scalar_lea.vmem %s1, 66
  %88 = vst.msk [vmem:[%s87] sm:$0x4] %vm82, %v81
  %s89 = scalar_lea.vmem %s1, 97
  %90 = vst.msk [vmem:[%s89] sm:$0x8] %vm82, %v81
  %s91 = scalar_lea.vmem %s1, 128
  %92 = vst.msk [vmem:[%s91] sm:$0x10] %vm82, %v81
  %s93 = scalar_lea.vmem %s1, 159
  %94 = vst.msk [vmem:[%s93] sm:$0x20] %vm82, %v81
  %s95 = scalar_lea.vmem %s1, 190
  %96 = vst.msk [vmem:[%s95] sm:$0x40] %vm82, %v81
  %s97 = scalar_lea.vmem %s1, 221
  %98 = vst.msk [vmem:[%s97] sm:$0x80] %vm82, %v81
  %v99 = vld [vmem:[%s0] sm:$0xff]
  %100 = vrot.lane.b32.xlu0 %v99, 108
  %v101 = vpop.permute.xlu0 %100
  %vm102 = vcmask 31744
  %s103 = scalar_lea.vmem %s1, 5
  %104 = vst.msk [vmem:[%s103] sm:$0x1] %vm102, %v101
  %s105 = scalar_lea.vmem %s1, 36
  %106 = vst.msk [vmem:[%s105] sm:$0x2] %vm102, %v101
  %s107 = scalar_lea.vmem %s1, 67
  %108 = vst.msk [vmem:[%s107] sm:$0x4] %vm102, %v101
  %s109 = scalar_lea.vmem %s1, 98
  %110 = vst.msk [vmem:[%s109] sm:$0x8] %vm102, %v101
  %s111 = scalar_lea.vmem %s1, 129
  %112 = vst.msk [vmem:[%s111] sm:$0x10] %vm102, %v101
  %s113 = scalar_lea.vmem %s1, 160
  %114 = vst.msk [vmem:[%s113] sm:$0x20] %vm102, %v101
  %s115 = scalar_lea.vmem %s1, 191
  %116 = vst.msk [vmem:[%s115] sm:$0x40] %vm102, %v101
  %s117 = scalar_lea.vmem %s1, 222
  %118 = vst.msk [vmem:[%s117] sm:$0x80] %vm102, %v101
  %v119 = vld [vmem:[%s0] sm:$0xff]
  %120 = vrot.lane.b32.xlu0 %v119, 104
  %v121 = vpop.permute.xlu0 %120
  %vm122 = vcmask 31744
  %s123 = scalar_lea.vmem %s1, 6
  %124 = vst.msk [vmem:[%s123] sm:$0x1] %vm122, %v121
  %s125 = scalar_lea.vmem %s1, 37
  %126 = vst.msk [vmem:[%s125] sm:$0x2] %vm122, %v121
  %s127 = scalar_lea.vmem %s1, 68
  %128 = vst.msk [vmem:[%s127] sm:$0x4] %vm122, %v121
  %s129 = scalar_lea.vmem %s1, 99
  %130 = vst.msk [vmem:[%s129] sm:$0x8] %vm122, %v121
  %s131 = scalar_lea.vmem %s1, 130
  %132 = vst.msk [vmem:[%s131] sm:$0x10] %vm122, %v121
  %s133 = scalar_lea.vmem %s1, 161
  %134 = vst.msk [vmem:[%s133] sm:$0x20] %vm122, %v121
  %s135 = scalar_lea.vmem %s1, 192
  %136 = vst.msk [vmem:[%s135] sm:$0x40] %vm122, %v121
  %s137 = scalar_lea.vmem %s1, 223
  %138 = vst.msk [vmem:[%s137] sm:$0x80] %vm122, %v121
  %v139 = vld [vmem:[%s0] sm:$0xff]
  %140 = vrot.lane.b32.xlu0 %v139, 100
  %v141 = vpop.permute.xlu0 %140
  %vm142 = vcmask 31744
  %s143 = scalar_lea.vmem %s1, 7
  %144 = vst.msk [vmem:[%s143] sm:$0x1] %vm142, %v141
  %s145 = scalar_lea.vmem %s1, 38
  %146 = vst.msk [vmem:[%s145] sm:$0x2] %vm142, %v141
  %s147 = scalar_lea.vmem %s1, 69
  %148 = vst.msk [vmem:[%s147] sm:$0x4] %vm142, %v141
  %s149 = scalar_lea.vmem %s1, 100
  %150 = vst.msk [vmem:[%s149] sm:$0x8] %vm142, %v141
  %s151 = scalar_lea.vmem %s1, 131
  %152 = vst.msk [vmem:[%s151] sm:$0x10] %vm142, %v141
  %s153 = scalar_lea.vmem %s1, 162
  %154 = vst.msk [vmem:[%s153] sm:$0x20] %vm142, %v141
  %s155 = scalar_lea.vmem %s1, 193
  %156 = vst.msk [vmem:[%s155] sm:$0x40] %vm142, %v141
  %s157 = scalar_lea.vmem %s1, 224
  %158 = vst.msk [vmem:[%s157] sm:$0x80] %vm142, %v141
  %v159 = vld [vmem:[%s0] sm:$0xff]
  %160 = vrot.lane.b32.xlu0 %v159, 96
  %v161 = vpop.permute.xlu0 %160
  %vm162 = vcmask 31744
  %s163 = scalar_lea.vmem %s1, 8
  %164 = vst.msk [vmem:[%s163] sm:$0x1] %vm162, %v161
  %s165 = scalar_lea.vmem %s1, 39
  %166 = vst.msk [vmem:[%s165] sm:$0x2] %vm162, %v161
  %s167 = scalar_lea.vmem %s1, 70
  %168 = vst.msk [vmem:[%s167] sm:$0x4] %vm162, %v161
  %s169 = scalar_lea.vmem %s1, 101
  %170 = vst.msk [vmem:[%s169] sm:$0x8] %vm162, %v161
  %s171 = scalar_lea.vmem %s1, 132
  %172 = vst.msk [vmem:[%s171] sm:$0x10] %vm162, %v161
  %s173 = scalar_lea.vmem %s1, 163
  %174 = vst.msk [vmem:[%s173] sm:$0x20] %vm162, %v161
  %s175 = scalar_lea.vmem %s1, 194
  %176 = vst.msk [vmem:[%s175] sm:$0x40] %vm162, %v161
  %s177 = scalar_lea.vmem %s1, 225
  %178 = vst.msk [vmem:[%s177] sm:$0x80] %vm162, %v161
  %v179 = vld [vmem:[%s0] sm:$0xff]
  %180 = vrot.lane.b32.xlu0 %v179, 92
  %v181 = vpop.permute.xlu0 %180
  %vm182 = vcmask 31744
  %s183 = scalar_lea.vmem %s1, 9
  %184 = vst.msk [vmem:[%s183] sm:$0x1] %vm182, %v181
  %s185 = scalar_lea.vmem %s1, 40
  %186 = vst.msk [vmem:[%s185] sm:$0x2] %vm182, %v181
  %s187 = scalar_lea.vmem %s1, 71
  %188 = vst.msk [vmem:[%s187] sm:$0x4] %vm182, %v181
  %s189 = scalar_lea.vmem %s1, 102
  %190 = vst.msk [vmem:[%s189] sm:$0x8] %vm182, %v181
  %s191 = scalar_lea.vmem %s1, 133
  %192 = vst.msk [vmem:[%s191] sm:$0x10] %vm182, %v181
  %s193 = scalar_lea.vmem %s1, 164
  %194 = vst.msk [vmem:[%s193] sm:$0x20] %vm182, %v181
  %s195 = scalar_lea.vmem %s1, 195
  %196 = vst.msk [vmem:[%s195] sm:$0x40] %vm182, %v181
  %s197 = scalar_lea.vmem %s1, 226
  %198 = vst.msk [vmem:[%s197] sm:$0x80] %vm182, %v181
  %v199 = vld [vmem:[%s0] sm:$0xff]
  %200 = vrot.lane.b32.xlu0 %v199, 88
  %v201 = vpop.permute.xlu0 %200
  %vm202 = vcmask 31744
  %s203 = scalar_lea.vmem %s1, 10
  %204 = vst.msk [vmem:[%s203] sm:$0x1] %vm202, %v201
  %s205 = scalar_lea.vmem %s1, 41
  %206 = vst.msk [vmem:[%s205] sm:$0x2] %vm202, %v201
  %s207 = scalar_lea.vmem %s1, 72
  %208 = vst.msk [vmem:[%s207] sm:$0x4] %vm202, %v201
  %s209 = scalar_lea.vmem %s1, 103
  %210 = vst.msk [vmem:[%s209] sm:$0x8] %vm202, %v201
  %s211 = scalar_lea.vmem %s1, 134
  %212 = vst.msk [vmem:[%s211] sm:$0x10] %vm202, %v201
  %s213 = scalar_lea.vmem %s1, 165
  %214 = vst.msk [vmem:[%s213] sm:$0x20] %vm202, %v201
  %s215 = scalar_lea.vmem %s1, 196
  %216 = vst.msk [vmem:[%s215] sm:$0x40] %vm202, %v201
  %s217 = scalar_lea.vmem %s1, 227
  %218 = vst.msk [vmem:[%s217] sm:$0x80] %vm202, %v201
  %v219 = vld [vmem:[%s0] sm:$0xff]
  %220 = vrot.lane.b32.xlu0 %v219, 84
  %v221 = vpop.permute.xlu0 %220
  %vm222 = vcmask 31744
  %s223 = scalar_lea.vmem %s1, 11
  %224 = vst.msk [vmem:[%s223] sm:$0x1] %vm222, %v221
  %s225 = scalar_lea.vmem %s1, 42
  %226 = vst.msk [vmem:[%s225] sm:$0x2] %vm222, %v221
  %s227 = scalar_lea.vmem %s1, 73
  %228 = vst.msk [vmem:[%s227] sm:$0x4] %vm222, %v221
  %s229 = scalar_lea.vmem %s1, 104
  %230 = vst.msk [vmem:[%s229] sm:$0x8] %vm222, %v221
  %s231 = scalar_lea.vmem %s1, 135
  %232 = vst.msk [vmem:[%s231] sm:$0x10] %vm222, %v221
  %s233 = scalar_lea.vmem %s1, 166
  %234 = vst.msk [vmem:[%s233] sm:$0x20] %vm222, %v221
  %s235 = scalar_lea.vmem %s1, 197
  %236 = vst.msk [vmem:[%s235] sm:$0x40] %vm222, %v221
  %s237 = scalar_lea.vmem %s1, 228
  %238 = vst.msk [vmem:[%s237] sm:$0x80] %vm222, %v221
  %v239 = vld [vmem:[%s0] sm:$0xff]
  %240 = vrot.lane.b32.xlu0 %v239, 80
  %v241 = vpop.permute.xlu0 %240
  %vm242 = vcmask 31744
  %s243 = scalar_lea.vmem %s1, 12
  %244 = vst.msk [vmem:[%s243] sm:$0x1] %vm242, %v241
  %s245 = scalar_lea.vmem %s1, 43
  %246 = vst.msk [vmem:[%s245] sm:$0x2] %vm242, %v241
  %s247 = scalar_lea.vmem %s1, 74
  %248 = vst.msk [vmem:[%s247] sm:$0x4] %vm242, %v241
  %s249 = scalar_lea.vmem %s1, 105
  %250 = vst.msk [vmem:[%s249] sm:$0x8] %vm242, %v241
  %s251 = scalar_lea.vmem %s1, 136
  %252 = vst.msk [vmem:[%s251] sm:$0x10] %vm242, %v241
  %s253 = scalar_lea.vmem %s1, 167
  %254 = vst.msk [vmem:[%s253] sm:$0x20] %vm242, %v241
  %s255 = scalar_lea.vmem %s1, 198
  %256 = vst.msk [vmem:[%s255] sm:$0x40] %vm242, %v241
  %s257 = scalar_lea.vmem %s1, 229
  %258 = vst.msk [vmem:[%s257] sm:$0x80] %vm242, %v241
  %v259 = vld [vmem:[%s0] sm:$0xff]
  %260 = vrot.lane.b32.xlu0 %v259, 76
  %v261 = vpop.permute.xlu0 %260
  %vm262 = vcmask 31744
  %s263 = scalar_lea.vmem %s1, 13
  %264 = vst.msk [vmem:[%s263] sm:$0x1] %vm262, %v261
  %s265 = scalar_lea.vmem %s1, 44
  %266 = vst.msk [vmem:[%s265] sm:$0x2] %vm262, %v261
  %s267 = scalar_lea.vmem %s1, 75
  %268 = vst.msk [vmem:[%s267] sm:$0x4] %vm262, %v261
  %s269 = scalar_lea.vmem %s1, 106
  %270 = vst.msk [vmem:[%s269] sm:$0x8] %vm262, %v261
  %s271 = scalar_lea.vmem %s1, 137
  %272 = vst.msk [vmem:[%s271] sm:$0x10] %vm262, %v261
  %s273 = scalar_lea.vmem %s1, 168
  %274 = vst.msk [vmem:[%s273] sm:$0x20] %vm262, %v261
  %s275 = scalar_lea.vmem %s1, 199
  %276 = vst.msk [vmem:[%s275] sm:$0x40] %vm262, %v261
  %s277 = scalar_lea.vmem %s1, 230
  %278 = vst.msk [vmem:[%s277] sm:$0x80] %vm262, %v261
  %v279 = vld [vmem:[%s0] sm:$0xff]
  %280 = vrot.lane.b32.xlu0 %v279, 72
  %v281 = vpop.permute.xlu0 %280
  %vm282 = vcmask 31744
  %s283 = scalar_lea.vmem %s1, 14
  %284 = vst.msk [vmem:[%s283] sm:$0x1] %vm282, %v281
  %s285 = scalar_lea.vmem %s1, 45
  %286 = vst.msk [vmem:[%s285] sm:$0x2] %vm282, %v281
  %s287 = scalar_lea.vmem %s1, 76
  %288 = vst.msk [vmem:[%s287] sm:$0x4] %vm282, %v281
  %s289 = scalar_lea.vmem %s1, 107
  %290 = vst.msk [vmem:[%s289] sm:$0x8] %vm282, %v281
  %s291 = scalar_lea.vmem %s1, 138
  %292 = vst.msk [vmem:[%s291] sm:$0x10] %vm282, %v281
  %s293 = scalar_lea.vmem %s1, 169
  %294 = vst.msk [vmem:[%s293] sm:$0x20] %vm282, %v281
  %s295 = scalar_lea.vmem %s1, 200
  %296 = vst.msk [vmem:[%s295] sm:$0x40] %vm282, %v281
  %s297 = scalar_lea.vmem %s1, 231
  %298 = vst.msk [vmem:[%s297] sm:$0x80] %vm282, %v281
  %v299 = vld [vmem:[%s0] sm:$0xff]
  %300 = vrot.lane.b32.xlu0 %v299, 68
  %v301 = vpop.permute.xlu0 %300
  %vm302 = vcmask 31744
  %s303 = scalar_lea.vmem %s1, 15
  %304 = vst.msk [vmem:[%s303] sm:$0x1] %vm302, %v301
  %s305 = scalar_lea.vmem %s1, 46
  %306 = vst.msk [vmem:[%s305] sm:$0x2] %vm302, %v301
  %s307 = scalar_lea.vmem %s1, 77
  %308 = vst.msk [vmem:[%s307] sm:$0x4] %vm302, %v301
  %s309 = scalar_lea.vmem %s1, 108
  %310 = vst.msk [vmem:[%s309] sm:$0x8] %vm302, %v301
  %s311 = scalar_lea.vmem %s1, 139
  %312 = vst.msk [vmem:[%s311] sm:$0x10] %vm302, %v301
  %s313 = scalar_lea.vmem %s1, 170
  %314 = vst.msk [vmem:[%s313] sm:$0x20] %vm302, %v301
  %s315 = scalar_lea.vmem %s1, 201
  %316 = vst.msk [vmem:[%s315] sm:$0x40] %vm302, %v301
  %s317 = scalar_lea.vmem %s1, 232
  %318 = vst.msk [vmem:[%s317] sm:$0x80] %vm302, %v301
  %v319 = vld [vmem:[%s0] sm:$0xff]
  %320 = vrot.lane.b32.xlu0 %v319, 64
  %v321 = vpop.permute.xlu0 %320
  %vm322 = vcmask 31744
  %s323 = scalar_lea.vmem %s1, 16
  %324 = vst.msk [vmem:[%s323] sm:$0x1] %vm322, %v321
  %s325 = scalar_lea.vmem %s1, 47
  %326 = vst.msk [vmem:[%s325] sm:$0x2] %vm322, %v321
  %s327 = scalar_lea.vmem %s1, 78
  %328 = vst.msk [vmem:[%s327] sm:$0x4] %vm322, %v321
  %s329 = scalar_lea.vmem %s1, 109
  %330 = vst.msk [vmem:[%s329] sm:$0x8] %vm322, %v321
  %s331 = scalar_lea.vmem %s1, 140
  %332 = vst.msk [vmem:[%s331] sm:$0x10] %vm322, %v321
  %s333 = scalar_lea.vmem %s1, 171
  %334 = vst.msk [vmem:[%s333] sm:$0x20] %vm322, %v321
  %s335 = scalar_lea.vmem %s1, 202
  %336 = vst.msk [vmem:[%s335] sm:$0x40] %vm322, %v321
  %s337 = scalar_lea.vmem %s1, 233
  %338 = vst.msk [vmem:[%s337] sm:$0x80] %vm322, %v321
  %v339 = vld [vmem:[%s0] sm:$0xff]
  %340 = vrot.lane.b32.xlu0 %v339, 60
  %v341 = vpop.permute.xlu0 %340
  %vm342 = vcmask 31744
  %s343 = scalar_lea.vmem %s1, 17
  %344 = vst.msk [vmem:[%s343] sm:$0x1] %vm342, %v341
  %s345 = scalar_lea.vmem %s1, 48
  %346 = vst.msk [vmem:[%s345] sm:$0x2] %vm342, %v341
  %s347 = scalar_lea.vmem %s1, 79
  %348 = vst.msk [vmem:[%s347] sm:$0x4] %vm342, %v341
  %s349 = scalar_lea.vmem %s1, 110
  %350 = vst.msk [vmem:[%s349] sm:$0x8] %vm342, %v341
  %s351 = scalar_lea.vmem %s1, 141
  %352 = vst.msk [vmem:[%s351] sm:$0x10] %vm342, %v341
  %s353 = scalar_lea.vmem %s1, 172
  %354 = vst.msk [vmem:[%s353] sm:$0x20] %vm342, %v341
  %s355 = scalar_lea.vmem %s1, 203
  %356 = vst.msk [vmem:[%s355] sm:$0x40] %vm342, %v341
  %s357 = scalar_lea.vmem %s1, 234
  %358 = vst.msk [vmem:[%s357] sm:$0x80] %vm342, %v341
  %v359 = vld [vmem:[%s0] sm:$0xff]
  %360 = vrot.lane.b32.xlu0 %v359, 56
  %v361 = vpop.permute.xlu0 %360
  %vm362 = vcmask 31744
  %s363 = scalar_lea.vmem %s1, 18
  %364 = vst.msk [vmem:[%s363] sm:$0x1] %vm362, %v361
  %s365 = scalar_lea.vmem %s1, 49
  %366 = vst.msk [vmem:[%s365] sm:$0x2] %vm362, %v361
  %s367 = scalar_lea.vmem %s1, 80
  %368 = vst.msk [vmem:[%s367] sm:$0x4] %vm362, %v361
  %s369 = scalar_lea.vmem %s1, 111
  %370 = vst.msk [vmem:[%s369] sm:$0x8] %vm362, %v361
  %s371 = scalar_lea.vmem %s1, 142
  %372 = vst.msk [vmem:[%s371] sm:$0x10] %vm362, %v361
  %s373 = scalar_lea.vmem %s1, 173
  %374 = vst.msk [vmem:[%s373] sm:$0x20] %vm362, %v361
  %s375 = scalar_lea.vmem %s1, 204
  %376 = vst.msk [vmem:[%s375] sm:$0x40] %vm362, %v361
  %s377 = scalar_lea.vmem %s1, 235
  %378 = vst.msk [vmem:[%s377] sm:$0x80] %vm362, %v361
  %v379 = vld [vmem:[%s0] sm:$0xff]
  %380 = vrot.lane.b32.xlu0 %v379, 52
  %v381 = vpop.permute.xlu0 %380
  %vm382 = vcmask 31744
  %s383 = scalar_lea.vmem %s1, 19
  %384 = vst.msk [vmem:[%s383] sm:$0x1] %vm382, %v381
  %s385 = scalar_lea.vmem %s1, 50
  %386 = vst.msk [vmem:[%s385] sm:$0x2] %vm382, %v381
  %s387 = scalar_lea.vmem %s1, 81
  %388 = vst.msk [vmem:[%s387] sm:$0x4] %vm382, %v381
  %s389 = scalar_lea.vmem %s1, 112
  %390 = vst.msk [vmem:[%s389] sm:$0x8] %vm382, %v381
  %s391 = scalar_lea.vmem %s1, 143
  %392 = vst.msk [vmem:[%s391] sm:$0x10] %vm382, %v381
  %s393 = scalar_lea.vmem %s1, 174
  %394 = vst.msk [vmem:[%s393] sm:$0x20] %vm382, %v381
  %s395 = scalar_lea.vmem %s1, 205
  %396 = vst.msk [vmem:[%s395] sm:$0x40] %vm382, %v381
  %s397 = scalar_lea.vmem %s1, 236
  %398 = vst.msk [vmem:[%s397] sm:$0x80] %vm382, %v381
  %v399 = vld [vmem:[%s0] sm:$0xff]
  %400 = vrot.lane.b32.xlu0 %v399, 48
  %v401 = vpop.permute.xlu0 %400
  %vm402 = vcmask 31744
  %s403 = scalar_lea.vmem %s1, 20
  %404 = vst.msk [vmem:[%s403] sm:$0x1] %vm402, %v401
  %s405 = scalar_lea.vmem %s1, 51
  %406 = vst.msk [vmem:[%s405] sm:$0x2] %vm402, %v401
  %s407 = scalar_lea.vmem %s1, 82
  %408 = vst.msk [vmem:[%s407] sm:$0x4] %vm402, %v401
  %s409 = scalar_lea.vmem %s1, 113
  %410 = vst.msk [vmem:[%s409] sm:$0x8] %vm402, %v401
  %s411 = scalar_lea.vmem %s1, 144
  %412 = vst.msk [vmem:[%s411] sm:$0x10] %vm402, %v401
  %s413 = scalar_lea.vmem %s1, 175
  %414 = vst.msk [vmem:[%s413] sm:$0x20] %vm402, %v401
  %s415 = scalar_lea.vmem %s1, 206
  %416 = vst.msk [vmem:[%s415] sm:$0x40] %vm402, %v401
  %s417 = scalar_lea.vmem %s1, 237
  %418 = vst.msk [vmem:[%s417] sm:$0x80] %vm402, %v401
  %v419 = vld [vmem:[%s0] sm:$0xff]
  %420 = vrot.lane.b32.xlu0 %v419, 44
  %v421 = vpop.permute.xlu0 %420
  %vm422 = vcmask 31744
  %s423 = scalar_lea.vmem %s1, 21
  %424 = vst.msk [vmem:[%s423] sm:$0x1] %vm422, %v421
  %s425 = scalar_lea.vmem %s1, 52
  %426 = vst.msk [vmem:[%s425] sm:$0x2] %vm422, %v421
  %s427 = scalar_lea.vmem %s1, 83
  %428 = vst.msk [vmem:[%s427] sm:$0x4] %vm422, %v421
  %s429 = scalar_lea.vmem %s1, 114
  %430 = vst.msk [vmem:[%s429] sm:$0x8] %vm422, %v421
  %s431 = scalar_lea.vmem %s1, 145
  %432 = vst.msk [vmem:[%s431] sm:$0x10] %vm422, %v421
  %s433 = scalar_lea.vmem %s1, 176
  %434 = vst.msk [vmem:[%s433] sm:$0x20] %vm422, %v421
  %s435 = scalar_lea.vmem %s1, 207
  %436 = vst.msk [vmem:[%s435] sm:$0x40] %vm422, %v421
  %s437 = scalar_lea.vmem %s1, 238
  %438 = vst.msk [vmem:[%s437] sm:$0x80] %vm422, %v421
  %v439 = vld [vmem:[%s0] sm:$0xff]
  %440 = vrot.lane.b32.xlu0 %v439, 40
  %v441 = vpop.permute.xlu0 %440
  %vm442 = vcmask 31744
  %s443 = scalar_lea.vmem %s1, 22
  %444 = vst.msk [vmem:[%s443] sm:$0x1] %vm442, %v441
  %s445 = scalar_lea.vmem %s1, 53
  %446 = vst.msk [vmem:[%s445] sm:$0x2] %vm442, %v441
  %s447 = scalar_lea.vmem %s1, 84
  %448 = vst.msk [vmem:[%s447] sm:$0x4] %vm442, %v441
  %s449 = scalar_lea.vmem %s1, 115
  %450 = vst.msk [vmem:[%s449] sm:$0x8] %vm442, %v441
  %s451 = scalar_lea.vmem %s1, 146
  %452 = vst.msk [vmem:[%s451] sm:$0x10] %vm442, %v441
  %s453 = scalar_lea.vmem %s1, 177
  %454 = vst.msk [vmem:[%s453] sm:$0x20] %vm442, %v441
  %s455 = scalar_lea.vmem %s1, 208
  %456 = vst.msk [vmem:[%s455] sm:$0x40] %vm442, %v441
  %s457 = scalar_lea.vmem %s1, 239
  %458 = vst.msk [vmem:[%s457] sm:$0x80] %vm442, %v441
  %v459 = vld [vmem:[%s0] sm:$0xff]
  %460 = vrot.lane.b32.xlu0 %v459, 36
  %v461 = vpop.permute.xlu0 %460
  %vm462 = vcmask 31744
  %s463 = scalar_lea.vmem %s1, 23
  %464 = vst.msk [vmem:[%s463] sm:$0x1] %vm462, %v461
  %s465 = scalar_lea.vmem %s1, 54
  %466 = vst.msk [vmem:[%s465] sm:$0x2] %vm462, %v461
  %s467 = scalar_lea.vmem %s1, 85
  %468 = vst.msk [vmem:[%s467] sm:$0x4] %vm462, %v461
  %s469 = scalar_lea.vmem %s1, 116
  %470 = vst.msk [vmem:[%s469] sm:$0x8] %vm462, %v461
  %s471 = scalar_lea.vmem %s1, 147
  %472 = vst.msk [vmem:[%s471] sm:$0x10] %vm462, %v461
  %s473 = scalar_lea.vmem %s1, 178
  %474 = vst.msk [vmem:[%s473] sm:$0x20] %vm462, %v461
  %s475 = scalar_lea.vmem %s1, 209
  %476 = vst.msk [vmem:[%s475] sm:$0x40] %vm462, %v461
  %s477 = scalar_lea.vmem %s1, 240
  %478 = vst.msk [vmem:[%s477] sm:$0x80] %vm462, %v461
  %v479 = vld [vmem:[%s0] sm:$0xff]
  %480 = vrot.lane.b32.xlu0 %v479, 32
  %v481 = vpop.permute.xlu0 %480
  %vm482 = vcmask 31744
  %s483 = scalar_lea.vmem %s1, 24
  %484 = vst.msk [vmem:[%s483] sm:$0x1] %vm482, %v481
  %s485 = scalar_lea.vmem %s1, 55
  %486 = vst.msk [vmem:[%s485] sm:$0x2] %vm482, %v481
  %s487 = scalar_lea.vmem %s1, 86
  %488 = vst.msk [vmem:[%s487] sm:$0x4] %vm482, %v481
  %s489 = scalar_lea.vmem %s1, 117
  %490 = vst.msk [vmem:[%s489] sm:$0x8] %vm482, %v481
  %s491 = scalar_lea.vmem %s1, 148
  %492 = vst.msk [vmem:[%s491] sm:$0x10] %vm482, %v481
  %s493 = scalar_lea.vmem %s1, 179
  %494 = vst.msk [vmem:[%s493] sm:$0x20] %vm482, %v481
  %s495 = scalar_lea.vmem %s1, 210
  %496 = vst.msk [vmem:[%s495] sm:$0x40] %vm482, %v481
  %s497 = scalar_lea.vmem %s1, 241
  %498 = vst.msk [vmem:[%s497] sm:$0x80] %vm482, %v481
  %v499 = vld [vmem:[%s0] sm:$0xff]
  %500 = vrot.lane.b32.xlu0 %v499, 28
  %v501 = vpop.permute.xlu0 %500
  %vm502 = vcmask 31744
  %s503 = scalar_lea.vmem %s1, 25
  %504 = vst.msk [vmem:[%s503] sm:$0x1] %vm502, %v501
  %s505 = scalar_lea.vmem %s1, 56
  %506 = vst.msk [vmem:[%s505] sm:$0x2] %vm502, %v501
  %s507 = scalar_lea.vmem %s1, 87
  %508 = vst.msk [vmem:[%s507] sm:$0x4] %vm502, %v501
  %s509 = scalar_lea.vmem %s1, 118
  %510 = vst.msk [vmem:[%s509] sm:$0x8] %vm502, %v501
  %s511 = scalar_lea.vmem %s1, 149
  %512 = vst.msk [vmem:[%s511] sm:$0x10] %vm502, %v501
  %s513 = scalar_lea.vmem %s1, 180
  %514 = vst.msk [vmem:[%s513] sm:$0x20] %vm502, %v501
  %s515 = scalar_lea.vmem %s1, 211
  %516 = vst.msk [vmem:[%s515] sm:$0x40] %vm502, %v501
  %s517 = scalar_lea.vmem %s1, 242
  %518 = vst.msk [vmem:[%s517] sm:$0x80] %vm502, %v501
  %v519 = vld [vmem:[%s0] sm:$0xff]
  %520 = vrot.lane.b32.xlu0 %v519, 24
  %v521 = vpop.permute.xlu0 %520
  %vm522 = vcmask 31744
  %s523 = scalar_lea.vmem %s1, 26
  %524 = vst.msk [vmem:[%s523] sm:$0x1] %vm522, %v521
  %s525 = scalar_lea.vmem %s1, 57
  %526 = vst.msk [vmem:[%s525] sm:$0x2] %vm522, %v521
  %s527 = scalar_lea.vmem %s1, 88
  %528 = vst.msk [vmem:[%s527] sm:$0x4] %vm522, %v521
  %s529 = scalar_lea.vmem %s1, 119
  %530 = vst.msk [vmem:[%s529] sm:$0x8] %vm522, %v521
  %s531 = scalar_lea.vmem %s1, 150
  %532 = vst.msk [vmem:[%s531] sm:$0x10] %vm522, %v521
  %s533 = scalar_lea.vmem %s1, 181
  %534 = vst.msk [vmem:[%s533] sm:$0x20] %vm522, %v521
  %s535 = scalar_lea.vmem %s1, 212
  %536 = vst.msk [vmem:[%s535] sm:$0x40] %vm522, %v521
  %s537 = scalar_lea.vmem %s1, 243
  %538 = vst.msk [vmem:[%s537] sm:$0x80] %vm522, %v521
  %v539 = vld [vmem:[%s0] sm:$0xff]
  %540 = vrot.lane.b32.xlu0 %v539, 20
  %v541 = vpop.permute.xlu0 %540
  %vm542 = vcmask 31744
  %s543 = scalar_lea.vmem %s1, 27
  %544 = vst.msk [vmem:[%s543] sm:$0x1] %vm542, %v541
  %s545 = scalar_lea.vmem %s1, 58
  %546 = vst.msk [vmem:[%s545] sm:$0x2] %vm542, %v541
  %s547 = scalar_lea.vmem %s1, 89
  %548 = vst.msk [vmem:[%s547] sm:$0x4] %vm542, %v541
  %s549 = scalar_lea.vmem %s1, 120
  %550 = vst.msk [vmem:[%s549] sm:$0x8] %vm542, %v541
  %s551 = scalar_lea.vmem %s1, 151
  %552 = vst.msk [vmem:[%s551] sm:$0x10] %vm542, %v541
  %s553 = scalar_lea.vmem %s1, 182
  %554 = vst.msk [vmem:[%s553] sm:$0x20] %vm542, %v541
  %s555 = scalar_lea.vmem %s1, 213
  %556 = vst.msk [vmem:[%s555] sm:$0x40] %vm542, %v541
  %s557 = scalar_lea.vmem %s1, 244
  %558 = vst.msk [vmem:[%s557] sm:$0x80] %vm542, %v541
  %v559 = vld [vmem:[%s0] sm:$0xff]
  %560 = vrot.lane.b32.xlu0 %v559, 16
  %v561 = vpop.permute.xlu0 %560
  %vm562 = vcmask 31744
  %s563 = scalar_lea.vmem %s1, 28
  %564 = vst.msk [vmem:[%s563] sm:$0x1] %vm562, %v561
  %s565 = scalar_lea.vmem %s1, 59
  %566 = vst.msk [vmem:[%s565] sm:$0x2] %vm562, %v561
  %s567 = scalar_lea.vmem %s1, 90
  %568 = vst.msk [vmem:[%s567] sm:$0x4] %vm562, %v561
  %s569 = scalar_lea.vmem %s1, 121
  %570 = vst.msk [vmem:[%s569] sm:$0x8] %vm562, %v561
  %s571 = scalar_lea.vmem %s1, 152
  %572 = vst.msk [vmem:[%s571] sm:$0x10] %vm562, %v561
  %s573 = scalar_lea.vmem %s1, 183
  %574 = vst.msk [vmem:[%s573] sm:$0x20] %vm562, %v561
  %s575 = scalar_lea.vmem %s1, 214
  %576 = vst.msk [vmem:[%s575] sm:$0x40] %vm562, %v561
  %s577 = scalar_lea.vmem %s1, 245
  %578 = vst.msk [vmem:[%s577] sm:$0x80] %vm562, %v561
  %v579 = vld [vmem:[%s0] sm:$0xff]
  %580 = vrot.lane.b32.xlu0 %v579, 12
  %v581 = vpop.permute.xlu0 %580
  %vm582 = vcmask 31744
  %s583 = scalar_lea.vmem %s1, 29
  %584 = vst.msk [vmem:[%s583] sm:$0x1] %vm582, %v581
  %s585 = scalar_lea.vmem %s1, 60
  %586 = vst.msk [vmem:[%s585] sm:$0x2] %vm582, %v581
  %s587 = scalar_lea.vmem %s1, 91
  %588 = vst.msk [vmem:[%s587] sm:$0x4] %vm582, %v581
  %s589 = scalar_lea.vmem %s1, 122
  %590 = vst.msk [vmem:[%s589] sm:$0x8] %vm582, %v581
  %s591 = scalar_lea.vmem %s1, 153
  %592 = vst.msk [vmem:[%s591] sm:$0x10] %vm582, %v581
  %s593 = scalar_lea.vmem %s1, 184
  %594 = vst.msk [vmem:[%s593] sm:$0x20] %vm582, %v581
  %s595 = scalar_lea.vmem %s1, 215
  %596 = vst.msk [vmem:[%s595] sm:$0x40] %vm582, %v581
  %s597 = scalar_lea.vmem %s1, 246
  %598 = vst.msk [vmem:[%s597] sm:$0x80] %vm582, %v581
  %v599 = vld [vmem:[%s0] sm:$0xff]
  %600 = vrot.lane.b32.xlu0 %v599, 8
  %v601 = vpop.permute.xlu0 %600
  %vm602 = vcmask 31744
  %s603 = scalar_lea.vmem %s1, 30
  %604 = vst.msk [vmem:[%s603] sm:$0x1] %vm602, %v601
  %s605 = scalar_lea.vmem %s1, 61
  %606 = vst.msk [vmem:[%s605] sm:$0x2] %vm602, %v601
  %s607 = scalar_lea.vmem %s1, 92
  %608 = vst.msk [vmem:[%s607] sm:$0x4] %vm602, %v601
  %s609 = scalar_lea.vmem %s1, 123
  %610 = vst.msk [vmem:[%s609] sm:$0x8] %vm602, %v601
  %s611 = scalar_lea.vmem %s1, 154
  %612 = vst.msk [vmem:[%s611] sm:$0x10] %vm602, %v601
  %s613 = scalar_lea.vmem %s1, 185
  %614 = vst.msk [vmem:[%s613] sm:$0x20] %vm602, %v601
  %s615 = scalar_lea.vmem %s1, 216
  %616 = vst.msk [vmem:[%s615] sm:$0x40] %vm602, %v601
  %s617 = scalar_lea.vmem %s1, 247
  %618 = vst.msk [vmem:[%s617] sm:$0x80] %vm602, %v601
  %v619 = vld [vmem:[%s0] sm:$0xff]
  %620 = vrot.lane.b32.xlu0 %v619, 4
  %v621 = vpop.permute.xlu0 %620
  %vm622 = vcmask 31744
  %s623 = scalar_lea.vmem %s1, 31
  %624 = vst.msk [vmem:[%s623] sm:$0x1] %vm622, %v621
  %s625 = scalar_lea.vmem %s1, 62
  %626 = vst.msk [vmem:[%s625] sm:$0x2] %vm622, %v621
  %s627 = scalar_lea.vmem %s1, 93
  %628 = vst.msk [vmem:[%s627] sm:$0x4] %vm622, %v621
  %s629 = scalar_lea.vmem %s1, 124
  %630 = vst.msk [vmem:[%s629] sm:$0x8] %vm622, %v621
  %s631 = scalar_lea.vmem %s1, 155
  %632 = vst.msk [vmem:[%s631] sm:$0x10] %vm622, %v621
  %s633 = scalar_lea.vmem %s1, 186
  %634 = vst.msk [vmem:[%s633] sm:$0x20] %vm622, %v621
  %s635 = scalar_lea.vmem %s1, 217
  %636 = vst.msk [vmem:[%s635] sm:$0x40] %vm622, %v621
  %s637 = scalar_lea.vmem %s1, 248
  %638 = vst.msk [vmem:[%s637] sm:$0x80] %vm622, %v621

// kernel: reglog_forward.2
$region0: #{reglog_forward.2}
  #allocation0 [shape = 'u32[]', space=smem, size = 0x4, offset = 0x4, fixed_abs, tag = 'smem constant byte address 0x4 - core index']
  #allocation1 [shape = 'u32[144,128]{1,0:T(1,128)}', space=vmem, size = 0x12000, scoped, tag = 'internal scratch']
  %s0 = inlined_call_operand.vmem [shape: f32[16,1024], index: 0, kind: input, shape index: {}]
  %s1 = inlined_call_operand.vmem [shape: f32[1,1024], index: 1, kind: output, shape index: {0}]
  %s2 = inlined_call_operand.vmem [shape: f32[1,1024], index: 2, kind: output, shape index: {1}]
  %3 = xla_tuple %s1, %s2
  %s4 = sld [smem:[#allocation0]]
  $region49: #{reglog_forward.2} parent=0
    _
  %s6 = ssub.s32 1, %s4
  %s7 = scalar_select 0, %s6, %s4
  loop: start=0, step=1, limit=10
  $region2: #{reglog_forward.2} parent=0 // loop_pre_header
    _
  $region3: #{reglog_forward.2} parent=0 // loop_header
    %s9 = sphi 0, %s13
    %p10 = scmp.ge.s32.totalorder %s9, 10
    %s16 = sphi 0, %s28
    %s17 = sphi 0, %s24
    %s18 = sphi 0, %s16
    %s19 = sphi 0, %s17
    %s20 = sphi 0, %s18
    %s21 = sphi 0, %s19
    %s33 = sphi 0, %s35
    %s36 = sphi 0, %s33
    %s37 = sphi 0, %s36
    %s53 = sphi 0, %s37
    %s59 = sphi 0, %s61
    %s62 = sphi 0, %s59
    %s63 = sphi 0, %s62
    %s79 = sphi 0, %s63
    %s85 = sphi 0, %s87
    %s88 = sphi 0, %s85
    %s89 = sphi 0, %s88
    %s105 = sphi 0, %s89
  $region4: #{reglog_forward.2} parent=0 // loop_header_branch
    %12 = sbr.rel (%p10) target = $region8
  $region5: #{reglog_forward.2} parent=0 // loop_body
    %s14 = ssub.s32 %s9, 1
    %s15 = ssub.s32 %s9, 2
    %s22 = sadd.s32 1, %s17
    %p23 = scmp.ge.s32.totalorder %s22, 2
    %s24 = scalar_select %p23, 0, %s22
    %s25 = sadd.s32 1, %s16
    %s26 = scalar_select %p23, %s25, %s16
    %p27 = scmp.ge.s32.totalorder %s26, 4
    %s28 = scalar_select %p27, 0, %s26
    %s29 = ssub.s32 %s17, %s24
    %s30 = ssub.s32 %s16, %s28
    %s31 = sor.u32 %s29, %s30
    %p32 = scmp.eq.s32.totalorder %s31, 0
    %s34 = sadd.s32 %s33, 1
    %s35 = scalar_select %p32, %s33, %s34
    %p38 = pneg %p32
    %p39 = scmp.eq.s32.totalorder %s9, 7
    %p40 = por %p38, %p39
    %p41 = scmp.ne.s32.totalorder %s33, %s36
    %p42 = scmp.eq.s32.totalorder %s9, 0
    %p43 = por %p41, %p42
    %p44 = scmp.ne.s32.totalorder %s33, %s36
    %p45 = scmp.eq.s32.totalorder %s14, 7
    %p46 = por %p44, %p45
    %p47 = scmp.ne.s32.totalorder %s36, %s37
    %p48 = scmp.eq.s32.totalorder %s14, 0
    %p49 = por %p47, %p48
    %p50 = scmp.ne.s32.totalorder %s36, %s37
    %p51 = scmp.eq.s32.totalorder %s15, 7
    %p52 = por %p50, %p51
    %p54 = scmp.ne.s32.totalorder %s37, %s53
    %p55 = scmp.eq.s32.totalorder %s15, 0
    %p56 = por %p54, %p55
    %s57 = ssub.s32 %s16, %s28
    %p58 = scmp.eq.s32.totalorder %s57, 0
    %s60 = sadd.s32 %s59, 1
    %s61 = scalar_select %p58, %s59, %s60
    %p64 = pneg %p58
    %p65 = scmp.eq.s32.totalorder %s9, 7
    %p66 = por %p64, %p65
    %p67 = scmp.ne.s32.totalorder %s59, %s62
    %p68 = scmp.eq.s32.totalorder %s9, 0
    %p69 = por %p67, %p68
    %p70 = scmp.ne.s32.totalorder %s59, %s62
    %p71 = scmp.eq.s32.totalorder %s14, 7
    %p72 = por %p70, %p71
    %p73 = scmp.ne.s32.totalorder %s62, %s63
    %p74 = scmp.eq.s32.totalorder %s14, 0
    %p75 = por %p73, %p74
    %p76 = scmp.ne.s32.totalorder %s62, %s63
    %p77 = scmp.eq.s32.totalorder %s15, 7
    %p78 = por %p76, %p77
    %p80 = scmp.ne.s32.totalorder %s63, %s79
    %p81 = scmp.eq.s32.totalorder %s15, 0
    %p82 = por %p80, %p81
    %s83 = ssub.s32 %s16, %s28
    %p84 = scmp.eq.s32.totalorder %s83, 0
    %s86 = sadd.s32 %s85, 1
    %s87 = scalar_select %p84, %s85, %s86
    %p90 = pneg %p84
    %p91 = scmp.eq.s32.totalorder %s9, 7
    %p92 = por %p90, %p91
    %p93 = scmp.ne.s32.totalorder %s85, %s88
    %p94 = scmp.eq.s32.totalorder %s9, 0
    %p95 = por %p93, %p94
    %p96 = scmp.ne.s32.totalorder %s85, %s88
    %p97 = scmp.eq.s32.totalorder %s14, 7
    %p98 = por %p96, %p97
    %p99 = scmp.ne.s32.totalorder %s88, %s89
    %p100 = scmp.eq.s32.totalorder %s14, 0
    %p101 = por %p99, %p100
    %p102 = scmp.ne.s32.totalorder %s88, %s89
    %p103 = scmp.eq.s32.totalorder %s15, 7
    %p104 = por %p102, %p103
    %p106 = scmp.ne.s32.totalorder %s89, %s105
    %p107 = scmp.eq.s32.totalorder %s15, 0
    %p108 = por %p106, %p107
    %p109 = scmp.le.s32.totalorder 1, %s9
    %p110 = scmp.lt.s32.totalorder %s9, 9
    %p111 = pnand %p109, %p110
    %p112 = pneg %p111
    // Predicated region
    $region9: #{reglog_forward.2} parent=5 // pred_check
      _
    $region10: #{reglog_forward.2} parent=5 // pred_check_branch
      %114 = sbr.rel (%p111) target = $region12
    $region11: #{reglog_forward.2} parent=5 // pred_region
      %s115 = ssub.s32 %s9, 1
    $region12: #{reglog_forward.2} parent=5 // pred_fallthru
      _
    %p116 = scmp.lt.s32.totalorder %s9, 8
    // Predicated region
    $region13: #{reglog_forward.2} parent=5 // pred_check
      %p117 = pneg %p116
    $region14: #{reglog_forward.2} parent=5 // pred_check_branch
      %119 = sbr.rel (%p117) target = $region16
    $region15: #{reglog_forward.2} parent=5 // pred_region
      // Predicated region
      $region17: #{reglog_forward.2} parent=15 // pred_check
        %p120 = pneg %p43
      $region18: #{reglog_forward.2} parent=15 // pred_check_branch
        %122 = sbr.rel (%p120) target = $region20
      $region19: #{reglog_forward.2} parent=15 // pred_region
        %s123 = smul.u32 2, %s16
        %p124 = scmp.lt.s32.totalorder %s17, 1
        %s125 = scalar_select %p124, %s17, 1
        %p126 = scmp.lt.s32.totalorder %s123, 7
        %s127 = scalar_select %p126, %s123, 7
        %s128 = smul.addr %s125, 8
        %s129 = sadd.s32 %s127, %s128
        %s130 = smul.addr %s129, 8
        %s131 = scalar_lea.vmem %s0, %s130
        %s132 = smul.u32 2, %s16
      $region20: #{reglog_forward.2} parent=15 // pred_fallthru
        _
    $region16: #{reglog_forward.2} parent=5 // pred_fallthru
      _
    %p133 = scmp.le.s32.totalorder 1, %s9
    %p134 = scmp.lt.s32.totalorder %s9, 9
    %p135 = pnand %p133, %p134
    %p136 = pneg %p135
    // Predicated region
    $region21: #{reglog_forward.2} parent=5 // pred_check
      _
    $region22: #{reglog_forward.2} parent=5 // pred_check_branch
      %138 = sbr.rel (%p135) target = $region24
    $region23: #{reglog_forward.2} parent=5 // pred_region
      %s139 = ssub.s32 %s9, 1
      %s140 = smul.u32 2, %s18
      %p141 = scmp.lt.s32.totalorder %s19, 1
      %s142 = scalar_select %p141, %s19, 1
      %p143 = scmp.lt.s32.totalorder %s140, 7
      %s144 = scalar_select %p143, %s140, 7
      %s145 = smul.addr %s142, 8
      %s146 = sadd.s32 %s144, %s145
      %s147 = smul.addr %s146, 8
      %s148 = scalar_lea.vmem %s0, %s147
      %p149 = pneg %p49
      %p150 = pneg %p46
      %p151 = pneg %p75
      %p152 = pneg %p72
      %s153 = smul.u32 2, %s18
      %p154 = scmp.lt.s32.totalorder %s153, 7
      %s155 = scalar_select %p154, %s153, 7
      %s156 = scalar_lea.vmem %s1, %s155
      %p157 = pneg %p101
      %p158 = pneg %p98
      %s159 = smul.u32 2, %s18
      %p160 = scmp.lt.s32.totalorder %s159, 7
      %s161 = scalar_select %p160, %s159, 7
      %s162 = scalar_lea.vmem %s2, %s161
      %s163 = smul.u32 2, %s18
      %p164 = scmp.lt.s32.totalorder %s19, 1
      %s165 = scalar_select %p164, %s19, 1
      %p166 = scmp.lt.s32.totalorder %s163, 7
      %s167 = scalar_select %p166, %s163, 7
      %s168 = smul.addr %s165, 8
      %s169 = sadd.s32 %s167, %s168
      %s170 = smul.addr %s169, 8
      %s171 = scalar_lea.vmem %s0, %s170
      %s172 = smul.u32 2, %s18
      %s173 = smul.u32 2, %s18
      %p174 = scmp.lt.s32.totalorder %s173, 7
      %s175 = scalar_select %p174, %s173, 7
      %s176 = scalar_lea.vmem %s1, %s175
      %s177 = smul.u32 2, %s18
      %s178 = smul.u32 2, %s18
      %p179 = scmp.lt.s32.totalorder %s178, 7
      %s180 = scalar_select %p179, %s178, 7
      %s181 = scalar_lea.vmem %s2, %s180
      %s182 = smul.u32 2, %s18
      %p183 = scmp.eq.s32.totalorder %s19, 0
      // Predicated region
      $region25: #{reglog_forward.2} parent=23 // pred_check
        %p184 = pneg %p183
      $region26: #{reglog_forward.2} parent=23 // pred_check_branch
        %186 = sbr.rel (%p184) target = $region28
      $region27: #{reglog_forward.2} parent=23 // pred_region
        %v187 = vlaneseq
        %vm188 = vcmp.ge.s32.totalorder %v187, 0
        %vm189 = vcmp.lt.s32.totalorder %v187, 256
        %vm190 = vmand %vm188, %vm189
        %191 = vst.msk [vmem:[%s176] sm:$0x3] %vm190, 0.0
        %192 = vst.msk [vmem:[%s181] sm:$0x3] %vm190, 0.0
      $region28: #{reglog_forward.2} parent=23 // pred_fallthru
        _
      %v193 = vld [vmem:[%s171] sm:$0xff]
      %v194 = vld [vmem:[%s171 + $0x8] sm:$0xff]
      %v195 = vld [vmem:[%s176] sm:$0x3]
      %v196 = vrot.slane %v193, 4
      %v197 = vadd.f32 %v193, %v196
      %v198 = vrot.slane %v197, 2
      %v199 = vadd.f32 %v197, %v198
      %v200 = vrot.slane %v199, 1
      %v201 = vadd.f32 %v199, %v200
      %v202 = vrot.slane %v194, 4
      %v203 = vadd.f32 %v194, %v202
      %v204 = vrot.slane %v203, 2
      %v205 = vadd.f32 %v203, %v204
      %v206 = vrot.slane %v205, 1
      %v207 = vadd.f32 %v205, %v206
      %v210 = vcombine.low %v201, %v207
      %v212 = vunpack.c.l.s4 1966171168
      %v213 = vunpack.c.0.s8 %v212
      %v214 = vlaneseq
      %v215 = vshrl.u32 %v214, 7
      %v216 = vsub.s32 %v213, %v215
      %v217 = vrot.slane %v210, %v216
      %v219 = vunpack.c.l.s4 1966171168
      %v220 = vunpack.c.0.s8 %v219
      %v221 = vlaneseq
      %v222 = vshrl.u32 %v221, 7
      %v223 = vsub.s32 %v220, %v222
      %v224 = vrot.slane %v217, %v223
      %v226 = vadd.f32 %v195, %v224
      %v227 = vlaneseq
      %vm228 = vcmp.ge.s32.totalorder %v227, 0
      %vm229 = vcmp.lt.s32.totalorder %v227, 256
      %vm230 = vmand %vm228, %vm229
      %231 = vst.msk [vmem:[%s176] sm:$0x3] %vm230, %v226
      %v232 = vld [vmem:[%s181] sm:$0x3]
      %v233 = vmul.f32 %v193, %v193
      %v234 = vmul.f32 %v194, %v194
      %v235 = vrot.slane %v233, 4
      %v236 = vadd.f32 %v233, %v235
      %v237 = vrot.slane %v236, 2
      %v238 = vadd.f32 %v236, %v237
      %v239 = vrot.slane %v238, 1
      %v240 = vadd.f32 %v238, %v239
      %v241 = vrot.slane %v234, 4
      %v242 = vadd.f32 %v234, %v241
      %v243 = vrot.slane %v242, 2
      %v244 = vadd.f32 %v242, %v243
      %v245 = vrot.slane %v244, 1
      %v246 = vadd.f32 %v244, %v245
      %v249 = vcombine.low %v240, %v246
      %v251 = vunpack.c.l.s4 1966171168
      %v252 = vunpack.c.0.s8 %v251
      %v253 = vlaneseq
      %v254 = vshrl.u32 %v253, 7
      %v255 = vsub.s32 %v252, %v254
      %v256 = vrot.slane %v249, %v255
      %v258 = vunpack.c.l.s4 1966171168
      %v259 = vunpack.c.0.s8 %v258
      %v260 = vlaneseq
      %v261 = vshrl.u32 %v260, 7
      %v262 = vsub.s32 %v259, %v261
      %v263 = vrot.slane %v256, %v262
      %v265 = vadd.f32 %v232, %v263
      %266 = vst.msk [vmem:[%s181] sm:$0x3] %vm230, %v265
      %s267 = smul.u32 2, %s18
      %p268 = scmp.lt.s32.totalorder %s267, 7
      %s269 = scalar_select %p268, %s267, 7
      %s270 = scalar_lea.vmem %s1, %s269
      %s271 = smul.u32 2, %s18
      %p272 = scmp.lt.s32.totalorder %s271, 7
      %s273 = scalar_select %p272, %s271, 7
      %s274 = scalar_lea.vmem %s2, %s273
      // Predicated region
      $region29: #{reglog_forward.2} parent=23 // pred_check
        %p275 = pneg %p72
      $region30: #{reglog_forward.2} parent=23 // pred_check_branch
        %277 = sbr.rel (%p275) target = $region32
      $region31: #{reglog_forward.2} parent=23 // pred_region
        %s278 = smul.u32 2, %s18
      $region32: #{reglog_forward.2} parent=23 // pred_fallthru
        _
      // Predicated region
      $region33: #{reglog_forward.2} parent=23 // pred_check
        %p279 = pneg %p98
      $region34: #{reglog_forward.2} parent=23 // pred_check_branch
        %281 = sbr.rel (%p279) target = $region36
      $region35: #{reglog_forward.2} parent=23 // pred_region
        %s282 = smul.u32 2, %s18
      $region36: #{reglog_forward.2} parent=23 // pred_fallthru
        _
    $region24: #{reglog_forward.2} parent=5 // pred_fallthru
      _
    %p283 = scmp.le.s32.totalorder 2, %s9
    // Predicated region
    $region37: #{reglog_forward.2} parent=5 // pred_check
      %p284 = pneg %p283
    $region38: #{reglog_forward.2} parent=5 // pred_check_branch
      %286 = sbr.rel (%p284) target = $region40
    $region39: #{reglog_forward.2} parent=5 // pred_region
      %s287 = ssub.s32 %s9, 2
      // Predicated region
      $region41: #{reglog_forward.2} parent=39 // pred_check
        %p288 = pneg %p78
      $region42: #{reglog_forward.2} parent=39 // pred_check_branch
        %290 = sbr.rel (%p288) target = $region44
      $region43: #{reglog_forward.2} parent=39 // pred_region
        %s291 = smul.u32 2, %s20
        %p292 = scmp.lt.s32.totalorder %s291, 7
        %s293 = scalar_select %p292, %s291, 7
        %s294 = scalar_lea.vmem %s1, %s293
      $region44: #{reglog_forward.2} parent=39 // pred_fallthru
        _
      // Predicated region
      $region45: #{reglog_forward.2} parent=39 // pred_check
        %p295 = pneg %p104
      $region46: #{reglog_forward.2} parent=39 // pred_check_branch
        %297 = sbr.rel (%p295) target = $region48
      $region47: #{reglog_forward.2} parent=39 // pred_region
        %s298 = smul.u32 2, %s20
        %p299 = scmp.lt.s32.totalorder %s298, 7
        %s300 = scalar_select %p299, %s298, 7
        %s301 = scalar_lea.vmem %s2, %s300
      $region48: #{reglog_forward.2} parent=39 // pred_fallthru
        _
    $region40: #{reglog_forward.2} parent=5 // pred_fallthru
      _
  $region6: #{reglog_forward.2} parent=0 // loop_footer
    %s13 = sadd.s32 1, %s9
  $region7: #{reglog_forward.2} parent=0 // loop_footer_branch
    %8 = sbr.rel target = $region3
  $region8: #{reglog_forward.2} parent=0 // loop_exit
    _

// kernel: reglog_forward.3
$region0: #{reglog_forward.3}
  #allocation0 [shape = 'u32[]', space=smem, size = 0x4, offset = 0x4, fixed_abs, tag = 'smem constant byte address 0x4 - core index']
  #allocation1 [shape = 'u32[144,128]{1,0:T(1,128)}', space=vmem, size = 0x12000, scoped, tag = 'internal scratch']
  %s0 = inlined_call_operand.vmem [shape: f32[16,1024], index: 0, kind: input, shape index: {}]
  %s1 = inlined_call_operand.vmem [shape: f32[1024,128], index: 1, kind: input, shape index: {}]
  %s2 = inlined_call_operand.vmem [shape: f32[1,128], index: 2, kind: input, shape index: {}]
  %s3 = inlined_call_operand.hbm [shape: f32[16,128], index: 3, kind: output, shape index: {}]
  %s4 = sld [smem:[#allocation0]]
  $region45: #{reglog_forward.3} parent=0
    _
  %s6 = ssub.s32 1, %s4
  %s7 = scalar_select 0, %s6, %s4
  $region1: #{reglog_forward.3} parent=0
    #allocation2 [shape = 'u8[8192]{0}', space=vmem, size = 0x2000, scoped, tag = 'output window, operand 0']
    #allocation3 [shape = 's32[2]{0}', space=sflag, size = 0x8, scoped, tag = 'scoped memory for reglog_forward.3']
    %8 = vsyncpa [#allocation3], 0
    %s9 = scalar_lea.sflag [#allocation3], 1
    %10 = vsyncpa %s9, 0
    loop: start=0, step=1, limit=4
    $region2: #{reglog_forward.3} parent=1 // loop_pre_header
      _
    $region3: #{reglog_forward.3} parent=1 // loop_header
      %s12 = sphi 0, %s16
      %p13 = scmp.ge.s32.totalorder %s12, 4
      %s22 = sphi 0, %s24
      %s25 = sphi 0, %s22
      %s26 = sphi 0, %s25
      %s42 = sphi 0, %s26
      %s46 = sphi 0, %s46
      %s48 = sphi 0, %s46
      %s49 = sphi 0, %s48
      %s63 = sphi 0, %s49
      %s67 = sphi 0, %s67
      %s69 = sphi 0, %s67
      %s70 = sphi 0, %s69
      %s84 = sphi 0, %s70
      %s90 = sphi 0, %s92
      %s93 = sphi 0, %s90
      %s94 = sphi 0, %s93
      %s110 = sphi 0, %s94
    $region4: #{reglog_forward.3} parent=1 // loop_header_branch
      %15 = sbr.rel (%p13) target = $region8
    $region5: #{reglog_forward.3} parent=1 // loop_body
      %s17 = ssub.s32 %s12, 1
      %s18 = ssub.s32 %s12, 2
      %s19 = sadd.s32 %s12, 1
      %s20 = ssub.s32 %s12, %s19
      %p21 = scmp.eq.s32.totalorder %s20, 0
      %s23 = sadd.s32 %s22, 1
      %s24 = scalar_select %p21, %s22, %s23
      %p27 = pneg %p21
      %p28 = scmp.eq.s32.totalorder %s12, 1
      %p29 = por %p27, %p28
      %p30 = scmp.ne.s32.totalorder %s22, %s25
      %p31 = scmp.eq.s32.totalorder %s12, 0
      %p32 = por %p30, %p31
      %p33 = scmp.ne.s32.totalorder %s22, %s25
      %p34 = scmp.eq.s32.totalorder %s17, 1
      %p35 = por %p33, %p34
      %p36 = scmp.ne.s32.totalorder %s25, %s26
      %p37 = scmp.eq.s32.totalorder %s17, 0
      %p38 = por %p36, %p37
      %p39 = scmp.ne.s32.totalorder %s25, %s26
      %p40 = scmp.eq.s32.totalorder %s18, 1
      %p41 = por %p39, %p40
      %p43 = scmp.ne.s32.totalorder %s26, %s42
      %p44 = scmp.eq.s32.totalorder %s18, 0
      %p45 = por %p43, %p44
      %s47 = sadd.s32 %s46, 1
      %p50 = scmp.eq.s32.totalorder %s12, 1
      %p51 = scmp.ne.s32.totalorder %s46, %s48
      %p52 = scmp.eq.s32.totalorder %s12, 0
      %p53 = por %p51, %p52
      %p54 = scmp.ne.s32.totalorder %s46, %s48
      %p55 = scmp.eq.s32.totalorder %s17, 1
      %p56 = por %p54, %p55
      %p57 = scmp.ne.s32.totalorder %s48, %s49
      %p58 = scmp.eq.s32.totalorder %s17, 0
      %p59 = por %p57, %p58
      %p60 = scmp.ne.s32.totalorder %s48, %s49
      %p61 = scmp.eq.s32.totalorder %s18, 1
      %p62 = por %p60, %p61
      %p64 = scmp.ne.s32.totalorder %s49, %s63
      %p65 = scmp.eq.s32.totalorder %s18, 0
      %p66 = por %p64, %p65
      %s68 = sadd.s32 %s67, 1
      %p71 = scmp.eq.s32.totalorder %s12, 1
      %p72 = scmp.ne.s32.totalorder %s67, %s69
      %p73 = scmp.eq.s32.totalorder %s12, 0
      %p74 = por %p72, %p73
      %p75 = scmp.ne.s32.totalorder %s67, %s69
      %p76 = scmp.eq.s32.totalorder %s17, 1
      %p77 = por %p75, %p76
      %p78 = scmp.ne.s32.totalorder %s69, %s70
      %p79 = scmp.eq.s32.totalorder %s17, 0
      %p80 = por %p78, %p79
      %p81 = scmp.ne.s32.totalorder %s69, %s70
      %p82 = scmp.eq.s32.totalorder %s18, 1
      %p83 = por %p81, %p82
      %p85 = scmp.ne.s32.totalorder %s70, %s84
      %p86 = scmp.eq.s32.totalorder %s18, 0
      %p87 = por %p85, %p86
      %s88 = ssub.s32 %s12, %s19
      %p89 = scmp.eq.s32.totalorder %s88, 0
      %s91 = sadd.s32 %s90, 1
      %s92 = scalar_select %p89, %s90, %s91
      %p95 = pneg %p89
      %p96 = scmp.eq.s32.totalorder %s12, 1
      %p97 = por %p95, %p96
      %p98 = scmp.ne.s32.totalorder %s90, %s93
      %p99 = scmp.eq.s32.totalorder %s12, 0
      %p100 = por %p98, %p99
      %p101 = scmp.ne.s32.totalorder %s90, %s93
      %p102 = scmp.eq.s32.totalorder %s17, 1
      %p103 = por %p101, %p102
      %p104 = scmp.ne.s32.totalorder %s93, %s94
      %p105 = scmp.eq.s32.totalorder %s17, 0
      %p106 = por %p104, %p105
      %p107 = scmp.ne.s32.totalorder %s93, %s94
      %p108 = scmp.eq.s32.totalorder %s18, 1
      %p109 = por %p107, %p108
      %p111 = scmp.ne.s32.totalorder %s94, %s110
      %p112 = scmp.eq.s32.totalorder %s18, 0
      %p113 = por %p111, %p112
      %p114 = scmp.le.s32.totalorder 1, %s12
      %p115 = scmp.lt.s32.totalorder %s12, 3
      %p116 = pnand %p114, %p115
      %p117 = pneg %p116
      // Predicated region
      $region9: #{reglog_forward.3} parent=5 // pred_check
        _
      $region10: #{reglog_forward.3} parent=5 // pred_check_branch
        %119 = sbr.rel (%p116) target = $region12
      $region11: #{reglog_forward.3} parent=5 // pred_region
        %s120 = ssub.s32 %s12, 1
        // Predicated region
        $region13: #{reglog_forward.3} parent=11 // pred_check
          %p121 = pneg %p59
        $region14: #{reglog_forward.3} parent=11 // pred_check_branch
          %123 = sbr.rel (%p121) target = $region16
        $region15: #{reglog_forward.3} parent=11 // pred_region
          _
        $region16: #{reglog_forward.3} parent=11 // pred_fallthru
          _
        // Predicated region
        $region17: #{reglog_forward.3} parent=11 // pred_check
          %p124 = pneg %p80
        $region18: #{reglog_forward.3} parent=11 // pred_check_branch
          %126 = sbr.rel (%p124) target = $region20
        $region19: #{reglog_forward.3} parent=11 // pred_region
          _
        $region20: #{reglog_forward.3} parent=11 // pred_fallthru
          _
      $region12: #{reglog_forward.3} parent=5 // pred_fallthru
        _
      %p127 = scmp.lt.s32.totalorder %s12, 2
      // Predicated region
      $region21: #{reglog_forward.3} parent=5 // pred_check
        %p128 = pneg %p127
      $region22: #{reglog_forward.3} parent=5 // pred_check_branch
        %130 = sbr.rel (%p128) target = $region24
      $region23: #{reglog_forward.3} parent=5 // pred_region
        // Predicated region
        $region25: #{reglog_forward.3} parent=23 // pred_check
          %p131 = pneg %p32
        $region26: #{reglog_forward.3} parent=23 // pred_check_branch
          %133 = sbr.rel (%p131) target = $region28
        $region27: #{reglog_forward.3} parent=23 // pred_region
          %p134 = scmp.lt.s32.totalorder %s12, 1
          %s135 = scalar_select %p134, %s12, 1
          %s136 = smul.addr %s135, 8
          %s137 = smul.addr %s136, 8
          %s138 = scalar_lea.vmem %s0, %s137
        $region28: #{reglog_forward.3} parent=23 // pred_fallthru
          _
      $region24: #{reglog_forward.3} parent=5 // pred_fallthru
        _
      %p139 = scmp.le.s32.totalorder 1, %s12
      %p140 = scmp.lt.s32.totalorder %s12, 3
      %p141 = pnand %p139, %p140
      %p142 = pneg %p141
      // Predicated region
      $region29: #{reglog_forward.3} parent=5 // pred_check
        _
      $region30: #{reglog_forward.3} parent=5 // pred_check_branch
        %144 = sbr.rel (%p141) target = $region32
      $region31: #{reglog_forward.3} parent=5 // pred_region
        %s145 = ssub.s32 %s12, 1
        %p146 = scmp.lt.s32.totalorder %s17, 1
        %s147 = scalar_select %p146, %s17, 1
        %s148 = smul.addr %s147, 8
        %s149 = smul.addr %s148, 8
        %s150 = scalar_lea.vmem %s0, %s149
        %p151 = pneg %p38
        %p152 = pneg %p35
        %p153 = pneg %p59
        %p154 = pneg %p56
        %p155 = pneg %p80
        %p156 = pneg %p77
        %p157 = pneg %p106
        %p158 = pneg %p103
        %s159 = sand.u32 %s93, 1
        %s160 = scalar_lea.sflag [#allocation3], %s159
        %s161 = sand.u32 %s93, 1
        %s162 = smul.addr %s161, 8
        %s163 = scalar_lea.vmem [#allocation2], %s162
        %p164 = scmp.lt.s32.totalorder %s17, 1
        %s165 = scalar_select %p164, %s17, 1
        %s166 = smul.addr %s165, 8
        %s167 = smul.addr %s166, 8
        %s168 = scalar_lea.vmem %s0, %s167
        %v169 = vld [vmem:[%s1] sm:$0xff]
        %v170 = vld [vmem:[%s1 + $0x8] sm:$0xff]
        %v171 = vld [vmem:[%s1 + $0x10] sm:$0xff]
        %v172 = vld [vmem:[%s1 + $0x18] sm:$0xff]
        %v173 = vld [vmem:[%s1 + $0x20] sm:$0xff]
        %v174 = vld [vmem:[%s1 + $0x28] sm:$0xff]
        %v175 = vld [vmem:[%s1 + $0x30] sm:$0xff]
        %v176 = vld [vmem:[%s1 + $0x38] sm:$0xff]
        %v177 = vld [vmem:[%s1 + $0x40] sm:$0xff]
        %v178 = vld [vmem:[%s1 + $0x48] sm:$0xff]
        %v179 = vld [vmem:[%s1 + $0x50] sm:$0xff]
        %v180 = vld [vmem:[%s1 + $0x58] sm:$0xff]
        %v181 = vld [vmem:[%s1 + $0x60] sm:$0xff]
        %v182 = vld [vmem:[%s1 + $0x68] sm:$0xff]
        %v183 = vld [vmem:[%s1 + $0x70] sm:$0xff]
        %v184 = vld [vmem:[%s1 + $0x78] sm:$0xff]
        %v185 = vld [vmem:[%s1 + $0x80] sm:$0xff]
        %v186 = vld [vmem:[%s1 + $0x88] sm:$0xff]
        %v187 = vld [vmem:[%s1 + $0x90] sm:$0xff]
        %v188 = vld [vmem:[%s1 + $0x98] sm:$0xff]
        %v189 = vld [vmem:[%s1 + $0xa0] sm:$0xff]
        %v190 = vld [vmem:[%s1 + $0xa8] sm:$0xff]
        %v191 = vld [vmem:[%s1 + $0xb0] sm:$0xff]
        %v192 = vld [vmem:[%s1 + $0xb8] sm:$0xff]
        %v193 = vld [vmem:[%s1 + $0xc0] sm:$0xff]
        %v194 = vld [vmem:[%s1 + $0xc8] sm:$0xff]
        %v195 = vld [vmem:[%s1 + $0xd0] sm:$0xff]
        %v196 = vld [vmem:[%s1 + $0xd8] sm:$0xff]
        %v197 = vld [vmem:[%s1 + $0xe0] sm:$0xff]
        %v198 = vld [vmem:[%s1 + $0xe8] sm:$0xff]
        %v199 = vld [vmem:[%s1 + $0xf0] sm:$0xff]
        %v200 = vld [vmem:[%s1 + $0xf8] sm:$0xff]
        %v201 = vld [vmem:[%s1 + $0x100] sm:$0xff]
        %v202 = vld [vmem:[%s1 + $0x108] sm:$0xff]
        %v203 = vld [vmem:[%s1 + $0x110] sm:$0xff]
        %v204 = vld [vmem:[%s1 + $0x118] sm:$0xff]
        %v205 = vld [vmem:[%s1 + $0x120] sm:$0xff]
        %v206 = vld [vmem:[%s1 + $0x128] sm:$0xff]
        %v207 = vld [vmem:[%s1 + $0x130] sm:$0xff]
        %v208 = vld [vmem:[%s1 + $0x138] sm:$0xff]
        %v209 = vld [vmem:[%s1 + $0x140] sm:$0xff]
        %v210 = vld [vmem:[%s1 + $0x148] sm:$0xff]
        %v211 = vld [vmem:[%s1 + $0x150] sm:$0xff]
        %v212 = vld [vmem:[%s1 + $0x158] sm:$0xff]
        %v213 = vld [vmem:[%s1 + $0x160] sm:$0xff]
        %v214 = vld [vmem:[%s1 + $0x168] sm:$0xff]
        %v215 = vld [vmem:[%s1 + $0x170] sm:$0xff]
        %v216 = vld [vmem:[%s1 + $0x178] sm:$0xff]
        %v217 = vld [vmem:[%s1 + $0x180] sm:$0xff]
        %v218 = vld [vmem:[%s1 + $0x188] sm:$0xff]
        %v219 = vld [vmem:[%s1 + $0x190] sm:$0xff]
        %v220 = vld [vmem:[%s1 + $0x198] sm:$0xff]
        %v221 = vld [vmem:[%s1 + $0x1a0] sm:$0xff]
        %v222 = vld [vmem:[%s1 + $0x1a8] sm:$0xff]
        %v223 = vld [vmem:[%s1 + $0x1b0] sm:$0xff]
        %v224 = vld [vmem:[%s1 + $0x1b8] sm:$0xff]
        %v225 = vld [vmem:[%s1 + $0x1c0] sm:$0xff]
        %v226 = vld [vmem:[%s1 + $0x1c8] sm:$0xff]
        %v227 = vld [vmem:[%s1 + $0x1d0] sm:$0xff]
        %v228 = vld [vmem:[%s1 + $0x1d8] sm:$0xff]
        %v229 = vld [vmem:[%s1 + $0x1e0] sm:$0xff]
        %v230 = vld [vmem:[%s1 + $0x1e8] sm:$0xff]
        %v231 = vld [vmem:[%s1 + $0x1f0] sm:$0xff]
        %v232 = vld [vmem:[%s1 + $0x1f8] sm:$0xff]
        %v233 = vld [vmem:[%s1 + $0x200] sm:$0xff]
        %v234 = vld [vmem:[%s1 + $0x208] sm:$0xff]
        %v235 = vld [vmem:[%s1 + $0x210] sm:$0xff]
        %v236 = vld [vmem:[%s1 + $0x218] sm:$0xff]
        %v237 = vld [vmem:[%s1 + $0x220] sm:$0xff]
        %v238 = vld [vmem:[%s1 + $0x228] sm:$0xff]
        %v239 = vld [vmem:[%s1 + $0x230] sm:$0xff]
        %v240 = vld [vmem:[%s1 + $0x238] sm:$0xff]
        %v241 = vld [vmem:[%s1 + $0x240] sm:$0xff]
        %v242 = vld [vmem:[%s1 + $0x248] sm:$0xff]
        %v243 = vld [vmem:[%s1 + $0x250] sm:$0xff]
        %v244 = vld [vmem:[%s1 + $0x258] sm:$0xff]
        %v245 = vld [vmem:[%s1 + $0x260] sm:$0xff]
        %v246 = vld [vmem:[%s1 + $0x268] sm:$0xff]
        %v247 = vld [vmem:[%s1 + $0x270] sm:$0xff]
        %v248 = vld [vmem:[%s1 + $0x278] sm:$0xff]
        %v249 = vld [vmem:[%s1 + $0x280] sm:$0xff]
        %v250 = vld [vmem:[%s1 + $0x288] sm:$0xff]
        %v251 = vld [vmem:[%s1 + $0x290] sm:$0xff]
        %v252 = vld [vmem:[%s1 + $0x298] sm:$0xff]
        %v253 = vld [vmem:[%s1 + $0x2a0] sm:$0xff]
        %v254 = vld [vmem:[%s1 + $0x2a8] sm:$0xff]
        %v255 = vld [vmem:[%s1 + $0x2b0] sm:$0xff]
        %v256 = vld [vmem:[%s1 + $0x2b8] sm:$0xff]
        %v257 = vld [vmem:[%s1 + $0x2c0] sm:$0xff]
        %v258 = vld [vmem:[%s1 + $0x2c8] sm:$0xff]
        %v259 = vld [vmem:[%s1 + $0x2d0] sm:$0xff]
        %v260 = vld [vmem:[%s1 + $0x2d8] sm:$0xff]
        %v261 = vld [vmem:[%s1 + $0x2e0] sm:$0xff]
        %v262 = vld [vmem:[%s1 + $0x2e8] sm:$0xff]
        %v263 = vld [vmem:[%s1 + $0x2f0] sm:$0xff]
        %v264 = vld [vmem:[%s1 + $0x2f8] sm:$0xff]
        %v265 = vld [vmem:[%s1 + $0x300] sm:$0xff]
        %v266 = vld [vmem:[%s1 + $0x308] sm:$0xff]
        %v267 = vld [vmem:[%s1 + $0x310] sm:$0xff]
        %v268 = vld [vmem:[%s1 + $0x318] sm:$0xff]
        %v269 = vld [vmem:[%s1 + $0x320] sm:$0xff]
        %v270 = vld [vmem:[%s1 + $0x328] sm:$0xff]
        %v271 = vld [vmem:[%s1 + $0x330] sm:$0xff]
        %v272 = vld [vmem:[%s1 + $0x338] sm:$0xff]
        %v273 = vld [vmem:[%s1 + $0x340] sm:$0xff]
        %v274 = vld [vmem:[%s1 + $0x348] sm:$0xff]
        %v275 = vld [vmem:[%s1 + $0x350] sm:$0xff]
        %v276 = vld [vmem:[%s1 + $0x358] sm:$0xff]
        %v277 = vld [vmem:[%s1 + $0x360] sm:$0xff]
        %v278 = vld [vmem:[%s1 + $0x368] sm:$0xff]
        %v279 = vld [vmem:[%s1 + $0x370] sm:$0xff]
        %v280 = vld [vmem:[%s1 + $0x378] sm:$0xff]
        %v281 = vld [vmem:[%s1 + $0x380] sm:$0xff]
        %v282 = vld [vmem:[%s1 + $0x388] sm:$0xff]
        %v283 = vld [vmem:[%s1 + $0x390] sm:$0xff]
        %v284 = vld [vmem:[%s1 + $0x398] sm:$0xff]
        %v285 = vld [vmem:[%s1 + $0x3a0] sm:$0xff]
        %v286 = vld [vmem:[%s1 + $0x3a8] sm:$0xff]
        %v287 = vld [vmem:[%s1 + $0x3b0] sm:$0xff]
        %v288 = vld [vmem:[%s1 + $0x3b8] sm:$0xff]
        %v289 = vld [vmem:[%s1 + $0x3c0] sm:$0xff]
        %v290 = vld [vmem:[%s1 + $0x3c8] sm:$0xff]
        %v291 = vld [vmem:[%s1 + $0x3d0] sm:$0xff]
        %v292 = vld [vmem:[%s1 + $0x3d8] sm:$0xff]
        %v293 = vld [vmem:[%s1 + $0x3e0] sm:$0xff]
        %v294 = vld [vmem:[%s1 + $0x3e8] sm:$0xff]
        %v295 = vld [vmem:[%s1 + $0x3f0] sm:$0xff]
        %v296 = vld [vmem:[%s1 + $0x3f8] sm:$0xff]
        %v297 = vld [vmem:[%s168] sm:$0xff]
        %v298 = vld [vmem:[%s168 + $0x8] sm:$0xff]
        %v299 = vld [vmem:[%s168 + $0x10] sm:$0xff]
        %v300 = vld [vmem:[%s168 + $0x18] sm:$0xff]
        %v301 = vld [vmem:[%s168 + $0x20] sm:$0xff]
        %v302 = vld [vmem:[%s168 + $0x28] sm:$0xff]
        %v303 = vld [vmem:[%s168 + $0x30] sm:$0xff]
        %v304 = vld [vmem:[%s168 + $0x38] sm:$0xff]
        %v305 = vld [vmem:[%s2] sm:$0x1]
        %v307 = vlaneseq
        %v308 = vshrl.u32 %v307, 7
        %v309 = vsub.s32 0, %v308
        %v310 = vrot.slane %v305, %v309
        %312 = vmatprep.subr.mxu0 0.0
        %313 = vmatpush1.msra.mxu0 %v169
        %314 = vmatprep.subr.mxu0 0.0
        %315 = vmatpush1.msra.mxu0 %v170
        %316 = vmatprep.subr.mxu0 0.0
        %317 = vmatpush1.msra.mxu0 %v171
        %318 = vmatprep.subr.mxu0 0.0
        %319 = vmatpush1.msra.mxu0 %v172
        %320 = vmatprep.subr.mxu0 0.0
        %321 = vmatpush1.msra.mxu0 %v173
        %322 = vmatprep.subr.mxu0 0.0
        %323 = vmatpush1.msra.mxu0 %v174
        %324 = vmatprep.subr.mxu0 0.0
        %325 = vmatpush1.msra.mxu0 %v175
        %326 = vmatprep.subr.mxu0 0.0
        %327 = vmatpush1.msra.mxu0 %v176
        %328 = vmatprep.subr.mxu0 0.0
        %329 = vmatpush1.msra.mxu0 %v177
        %330 = vmatprep.subr.mxu0 0.0
        %331 = vmatpush1.msra.mxu0 %v178
        %332 = vmatprep.subr.mxu0 0.0
        %333 = vmatpush1.msra.mxu0 %v179
        %334 = vmatprep.subr.mxu0 0.0
        %335 = vmatpush1.msra.mxu0 %v180
        %336 = vmatprep.subr.mxu0 0.0
        %337 = vmatpush1.msra.mxu0 %v181
        %338 = vmatprep.subr.mxu0 0.0
        %339 = vmatpush1.msra.mxu0 %v182
        %340 = vmatprep.subr.mxu0 0.0
        %341 = vmatpush1.msra.mxu0 %v183
        %342 = vmatprep.subr.mxu0 0.0
        %343 = vmatpush1.msra.mxu0 %v184
        %344 = vmatprep.subr.mxu0 0.0
        %345 = vmatpush1.msra.mxu0 %v185
        %346 = vmatprep.subr.mxu0 0.0
        %347 = vmatpush1.msra.mxu0 %v186
        %348 = vmatprep.subr.mxu0 0.0
        %349 = vmatpush1.msra.mxu0 %v187
        %350 = vmatprep.subr.mxu0 0.0
        %351 = vmatpush1.msra.mxu0 %v188
        %352 = vmatprep.subr.mxu0 0.0
        %353 = vmatpush1.msra.mxu0 %v189
        %354 = vmatprep.subr.mxu0 0.0
        %355 = vmatpush1.msra.mxu0 %v190
        %356 = vmatprep.subr.mxu0 0.0
        %357 = vmatpush1.msra.mxu0 %v191
        %358 = vmatprep.subr.mxu0 0.0
        %359 = vmatpush1.msra.mxu0 %v192
        %360 = vmatprep.subr.mxu0 0.0
        %361 = vmatpush1.msra.mxu0 %v193
        %362 = vmatprep.subr.mxu0 0.0
        %363 = vmatpush1.msra.mxu0 %v194
        %364 = vmatprep.subr.mxu0 0.0
        %365 = vmatpush1.msra.mxu0 %v195
        %366 = vmatprep.subr.mxu0 0.0
        %367 = vmatpush1.msra.mxu0 %v196
        %368 = vmatprep.subr.mxu0 0.0
        %369 = vmatpush1.msra.mxu0 %v197
        %370 = vmatprep.subr.mxu0 0.0
        %371 = vmatpush1.msra.mxu0 %v198
        %372 = vmatprep.subr.mxu0 0.0
        %373 = vmatpush1.msra.mxu0 %v199
        %374 = vmatprep.subr.mxu0 0.0
        %375 = vmatpush1.msra.mxu0 %v200
        %376 = vmatprep.mubr.f32.mxu0 %v298
        %377 = vmatmul.mubr.f32.gmra.mrb[0].mxu0 %v297
        %v378 = vpop.f32.mrb[0].mxu0
        %v379 = vadd.f32 %v310, %v378
        %v380 = vpop.f32.mrb[0].mxu0
        %381 = vdwg.mxu0
        %382 = vmatprep.subr.mxu0 0.0
        %383 = vmatpush1.msra.mxu0 %v201
        %384 = vmatprep.subr.mxu0 0.0
        %385 = vmatpush1.msra.mxu0 %v202
        %386 = vmatprep.subr.mxu0 0.0
        %387 = vmatpush1.msra.mxu0 %v203
        %388 = vmatprep.subr.mxu0 0.0
        %389 = vmatpush1.msra.mxu0 %v204
        %390 = vmatprep.subr.mxu0 0.0
        %391 = vmatpush1.msra.mxu0 %v205
        %392 = vmatprep.subr.mxu0 0.0
        %393 = vmatpush1.msra.mxu0 %v206
        %394 = vmatprep.subr.mxu0 0.0
        %395 = vmatpush1.msra.mxu0 %v207
        %396 = vmatprep.subr.mxu0 0.0
        %397 = vmatpush1.msra.mxu0 %v208
        %398 = vmatprep.subr.mxu0 0.0
        %399 = vmatpush1.msra.mxu0 %v209
        %400 = vmatprep.subr.mxu0 0.0
        %401 = vmatpush1.msra.mxu0 %v210
        %402 = vmatprep.subr.mxu0 0.0
        %403 = vmatpush1.msra.mxu0 %v211
        %404 = vmatprep.subr.mxu0 0.0
        %405 = vmatpush1.msra.mxu0 %v212
        %406 = vmatprep.subr.mxu0 0.0
        %407 = vmatpush1.msra.mxu0 %v213
        %408 = vmatprep.subr.mxu0 0.0
        %409 = vmatpush1.msra.mxu0 %v214
        %410 = vmatprep.subr.mxu0 0.0
        %411 = vmatpush1.msra.mxu0 %v215
        %412 = vmatprep.subr.mxu0 0.0
        %413 = vmatpush1.msra.mxu0 %v216
        %414 = vmatprep.subr.mxu0 0.0
        %415 = vmatpush1.msra.mxu0 %v217
        %416 = vmatprep.subr.mxu0 0.0
        %417 = vmatpush1.msra.mxu0 %v218
        %418 = vmatprep.subr.mxu0 0.0
        %419 = vmatpush1.msra.mxu0 %v219
        %420 = vmatprep.subr.mxu0 0.0
        %421 = vmatpush1.msra.mxu0 %v220
        %422 = vmatprep.subr.mxu0 0.0
        %423 = vmatpush1.msra.mxu0 %v221
        %424 = vmatprep.subr.mxu0 0.0
        %425 = vmatpush1.msra.mxu0 %v222
        %426 = vmatprep.subr.mxu0 0.0
        %427 = vmatpush1.msra.mxu0 %v223
        %428 = vmatprep.subr.mxu0 0.0
        %429 = vmatpush1.msra.mxu0 %v224
        %430 = vmatprep.subr.mxu0 0.0
        %431 = vmatpush1.msra.mxu0 %v225
        %432 = vmatprep.subr.mxu0 0.0
        %433 = vmatpush1.msra.mxu0 %v226
        %434 = vmatprep.subr.mxu0 0.0
        %435 = vmatpush1.msra.mxu0 %v227
        %436 = vmatprep.subr.mxu0 0.0
        %437 = vmatpush1.msra.mxu0 %v228
        %438 = vmatprep.subr.mxu0 0.0
        %439 = vmatpush1.msra.mxu0 %v229
        %440 = vmatprep.subr.mxu0 0.0
        %441 = vmatpush1.msra.mxu0 %v230
        %442 = vmatprep.subr.mxu0 0.0
        %443 = vmatpush1.msra.mxu0 %v231
        %444 = vmatprep.subr.mxu0 0.0
        %445 = vmatpush1.msra.mxu0 %v232
        %446 = vmatprep.mubr.f32.mxu0 %v300
        %447 = vmatmul.mubr.f32.gmra.mrb[0].mxu0 %v299
        %v448 = vpop.f32.mrb[0].mxu0
        %v449 = vadd.f32 %v379, %v448
        %v450 = vpop.f32.mrb[0].mxu0
        %451 = vdwg.mxu0
        %452 = vmatprep.subr.mxu0 0.0
        %453 = vmatpush1.msra.mxu0 %v233
        %454 = vmatprep.subr.mxu0 0.0
        %455 = vmatpush1.msra.mxu0 %v234
        %456 = vmatprep.subr.mxu0 0.0
        %457 = vmatpush1.msra.mxu0 %v235
        %458 = vmatprep.subr.mxu0 0.0
        %459 = vmatpush1.msra.mxu0 %v236
        %460 = vmatprep.subr.mxu0 0.0
        %461 = vmatpush1.msra.mxu0 %v237
        %462 = vmatprep.subr.mxu0 0.0
        %463 = vmatpush1.msra.mxu0 %v238
        %464 = vmatprep.subr.mxu0 0.0
        %465 = vmatpush1.msra.mxu0 %v239
        %466 = vmatprep.subr.mxu0 0.0
        %467 = vmatpush1.msra.mxu0 %v240
        %468 = vmatprep.subr.mxu0 0.0
        %469 = vmatpush1.msra.mxu0 %v241
        %470 = vmatprep.subr.mxu0 0.0
        %471 = vmatpush1.msra.mxu0 %v242
        %472 = vmatprep.subr.mxu0 0.0
        %473 = vmatpush1.msra.mxu0 %v243
        %474 = vmatprep.subr.mxu0 0.0
        %475 = vmatpush1.msra.mxu0 %v244
        %476 = vmatprep.subr.mxu0 0.0
        %477 = vmatpush1.msra.mxu0 %v245
        %478 = vmatprep.subr.mxu0 0.0
        %479 = vmatpush1.msra.mxu0 %v246
        %480 = vmatprep.subr.mxu0 0.0
        %481 = vmatpush1.msra.mxu0 %v247
        %482 = vmatprep.subr.mxu0 0.0
        %483 = vmatpush1.msra.mxu0 %v248
        %484 = vmatprep.subr.mxu0 0.0
        %485 = vmatpush1.msra.mxu0 %v249
        %486 = vmatprep.subr.mxu0 0.0
        %487 = vmatpush1.msra.mxu0 %v250
        %488 = vmatprep.subr.mxu0 0.0
        %489 = vmatpush1.msra.mxu0 %v251
        %490 = vmatprep.subr.mxu0 0.0
        %491 = vmatpush1.msra.mxu0 %v252
        %492 = vmatprep.subr.mxu0 0.0
        %493 = vmatpush1.msra.mxu0 %v253
        %494 = vmatprep.subr.mxu0 0.0
        %495 = vmatpush1.msra.mxu0 %v254
        %496 = vmatprep.subr.mxu0 0.0
        %497 = vmatpush1.msra.mxu0 %v255
        %498 = vmatprep.subr.mxu0 0.0
        %499 = vmatpush1.msra.mxu0 %v256
        %500 = vmatprep.subr.mxu0 0.0
        %501 = vmatpush1.msra.mxu0 %v257
        %502 = vmatprep.subr.mxu0 0.0
        %503 = vmatpush1.msra.mxu0 %v258
        %504 = vmatprep.subr.mxu0 0.0
        %505 = vmatpush1.msra.mxu0 %v259
        %506 = vmatprep.subr.mxu0 0.0
        %507 = vmatpush1.msra.mxu0 %v260
        %508 = vmatprep.subr.mxu0 0.0
        %509 = vmatpush1.msra.mxu0 %v261
        %510 = vmatprep.subr.mxu0 0.0
        %511 = vmatpush1.msra.mxu0 %v262
        %512 = vmatprep.subr.mxu0 0.0
        %513 = vmatpush1.msra.mxu0 %v263
        %514 = vmatprep.subr.mxu0 0.0
        %515 = vmatpush1.msra.mxu0 %v264
        %516 = vmatprep.mubr.f32.mxu0 %v302
        %517 = vmatmul.mubr.f32.gmra.mrb[0].mxu0 %v301
        %v518 = vpop.f32.mrb[0].mxu0
        %v519 = vadd.f32 %v449, %v518
        %v520 = vpop.f32.mrb[0].mxu0
        %521 = vdwg.mxu0
        %522 = vmatprep.subr.mxu0 0.0
        %523 = vmatpush1.msra.mxu0 %v265
        %524 = vmatprep.subr.mxu0 0.0
        %525 = vmatpush1.msra.mxu0 %v266
        %526 = vmatprep.subr.mxu0 0.0
        %527 = vmatpush1.msra.mxu0 %v267
        %528 = vmatprep.subr.mxu0 0.0
        %529 = vmatpush1.msra.mxu0 %v268
        %530 = vmatprep.subr.mxu0 0.0
        %531 = vmatpush1.msra.mxu0 %v269
        %532 = vmatprep.subr.mxu0 0.0
        %533 = vmatpush1.msra.mxu0 %v270
        %534 = vmatprep.subr.mxu0 0.0
        %535 = vmatpush1.msra.mxu0 %v271
        %536 = vmatprep.subr.mxu0 0.0
        %537 = vmatpush1.msra.mxu0 %v272
        %538 = vmatprep.subr.mxu0 0.0
        %539 = vmatpush1.msra.mxu0 %v273
        %540 = vmatprep.subr.mxu0 0.0
        %541 = vmatpush1.msra.mxu0 %v274
        %542 = vmatprep.subr.mxu0 0.0
        %543 = vmatpush1.msra.mxu0 %v275
        %544 = vmatprep.subr.mxu0 0.0
        %545 = vmatpush1.msra.mxu0 %v276
        %546 = vmatprep.subr.mxu0 0.0
        %547 = vmatpush1.msra.mxu0 %v277
        %548 = vmatprep.subr.mxu0 0.0
        %549 = vmatpush1.msra.mxu0 %v278
        %550 = vmatprep.subr.mxu0 0.0
        %551 = vmatpush1.msra.mxu0 %v279
        %552 = vmatprep.subr.mxu0 0.0
        %553 = vmatpush1.msra.mxu0 %v280
        %554 = vmatprep.subr.mxu0 0.0
        %555 = vmatpush1.msra.mxu0 %v281
        %556 = vmatprep.subr.mxu0 0.0
        %557 = vmatpush1.msra.mxu0 %v282
        %558 = vmatprep.subr.mxu0 0.0
        %559 = vmatpush1.msra.mxu0 %v283
        %560 = vmatprep.subr.mxu0 0.0
        %561 = vmatpush1.msra.mxu0 %v284
        %562 = vmatprep.subr.mxu0 0.0
        %563 = vmatpush1.msra.mxu0 %v285
        %564 = vmatprep.subr.mxu0 0.0
        %565 = vmatpush1.msra.mxu0 %v286
        %566 = vmatprep.subr.mxu0 0.0
        %567 = vmatpush1.msra.mxu0 %v287
        %568 = vmatprep.subr.mxu0 0.0
        %569 = vmatpush1.msra.mxu0 %v288
        %570 = vmatprep.subr.mxu0 0.0
        %571 = vmatpush1.msra.mxu0 %v289
        %572 = vmatprep.subr.mxu0 0.0
        %573 = vmatpush1.msra.mxu0 %v290
        %574 = vmatprep.subr.mxu0 0.0
        %575 = vmatpush1.msra.mxu0 %v291
        %576 = vmatprep.subr.mxu0 0.0
        %577 = vmatpush1.msra.mxu0 %v292
        %578 = vmatprep.subr.mxu0 0.0
        %579 = vmatpush1.msra.mxu0 %v293
        %580 = vmatprep.subr.mxu0 0.0
        %581 = vmatpush1.msra.mxu0 %v294
        %582 = vmatprep.subr.mxu0 0.0
        %583 = vmatpush1.msra.mxu0 %v295
        %584 = vmatprep.subr.mxu0 0.0
        %585 = vmatpush1.msra.mxu0 %v296
        %586 = vmatprep.mubr.f32.mxu0 %v304
        %587 = vmatmul.mubr.f32.gmra.mrb[0].mxu0 %v303
        %v588 = vpop.f32.mrb[0].mxu0
        %v589 = vadd.f32 %v519, %v588
        %v590 = vpop.f32.mrb[0].mxu0
        %591 = vdwg.mxu0
        %592 = vst [vmem:[%s163] sm:$0xff] %v589
        %s593 = sand.u32 %s93, 1
        %s594 = scalar_lea.sflag [#allocation3], %s593
        %s595 = sand.u32 %s93, 1
        %s596 = smul.addr %s595, 8
        %s597 = scalar_lea.vmem [#allocation2], %s596
        // Predicated region
        $region33: #{reglog_forward.3} parent=31 // pred_check
          %p598 = pneg %p103
        $region34: #{reglog_forward.3} parent=31 // pred_check_branch
          %600 = sbr.rel (%p598) target = $region36
        $region35: #{reglog_forward.3} parent=31 // pred_region
          %s602 = ssub.s32 128, 128
          %603 = vsyncadd %s594, %s602
          %s604 = smul.addr %s17, 128
          %s605 = scalar_lea.hbm %s3, %s604
          %s607 = sshll.u32 %s597, 4
          %s608 = int_to_ptr.vmem [resolvable:$true] %s607
          %610 = dma.vmem_to_hbm [thread:$0]  %s608, 128, %s605, %s594
        $region36: #{reglog_forward.3} parent=31 // pred_fallthru
          _
      $region32: #{reglog_forward.3} parent=5 // pred_fallthru
        _
      %p611 = scmp.le.s32.totalorder 2, %s12
      // Predicated region
      $region37: #{reglog_forward.3} parent=5 // pred_check
        %p612 = pneg %p611
      $region38: #{reglog_forward.3} parent=5 // pred_check_branch
        %614 = sbr.rel (%p612) target = $region40
      $region39: #{reglog_forward.3} parent=5 // pred_region
        %s615 = ssub.s32 %s12, 2
        // Predicated region
        $region41: #{reglog_forward.3} parent=39 // pred_check
          %p616 = pneg %p109
        $region42: #{reglog_forward.3} parent=39 // pred_check_branch
          %618 = sbr.rel (%p616) target = $region44
        $region43: #{reglog_forward.3} parent=39 // pred_region
          %s619 = sand.u32 %s94, 1
          %s620 = scalar_lea.sflag [#allocation3], %s619
          %s621 = sand.u32 %s94, 1
          %s622 = smul.addr %s621, 8
          %s623 = scalar_lea.vmem [#allocation2], %s622
          %624 = dma.done %s620, 128
        $region44: #{reglog_forward.3} parent=39 // pred_fallthru
          _
      $region40: #{reglog_forward.3} parent=5 // pred_fallthru
        _
    $region6: #{reglog_forward.3} parent=1 // loop_footer
      %s16 = sadd.s32 1, %s12
    $region7: #{reglog_forward.3} parent=1 // loop_footer_branch
      %11 = sbr.rel target = $region3
    $region8: #{reglog_forward.3} parent=1 // loop_exit
      _
    %625 = vsyncpa [#allocation3], 1
    %s626 = scalar_lea.sflag [#allocation3], 1
    %627 = vsyncpa %s626, 1

</llo_original>
